<compile_context>
chip_gen: v5e
topology: v5e:2x2
jax: 0.10.0
libtpu: 0.0.40
codegen_flags: <defaults>
</compile_context>

<pallas_src>
import functools

import jax
import jax.numpy as jnp
from jax.experimental import pallas as pl
from jax.experimental.pallas import tpu as pltpu


def _attention_kernel(hidden_ref, enc_ref, mask_ref,
                      wh_t_ref, we_t_ref, b_ref, v_ref, out_ref, hb_ref,
                      *, enc_batch_major, num_src_tiles):
    # hidden_ref: [tb, D]              enc_ref: [tb, ts, E2] or [ts, tb, E2]
    # mask_ref:   [tb, ts] (int32)     wh_t_ref: [D, D]   we_t_ref: [E2, D]
    # b_ref/v_ref:[1, D] (f32)         out_ref: [tb, S_pad] (f32, resident)
    # hb_ref:     [tb, D] f32 scratch (hidden projection + bias, per batch tile)
    s = pl.program_id(1)
    d = wh_t_ref.shape[1]

    # Hidden projection with the bias folded in, computed once per batch tile.
    @pl.when(s == 0)
    def _():
        hb_ref[...] = (jnp.dot(hidden_ref[...], wh_t_ref[...],
                               preferred_element_type=jnp.float32)
                       + b_ref[...])

    if enc_batch_major:
        tb, ts, e2 = enc_ref.shape                                  # [tb, ts, E2]
        e_proj = jnp.dot(enc_ref[...].reshape(tb * ts, e2), we_t_ref[...],
                         preferred_element_type=jnp.float32).reshape(tb, ts, d)
        energy = jnp.tanh(e_proj + hb_ref[...][:, None, :])         # f32
        scores = jnp.sum(energy * v_ref[...], axis=-1)              # [tb, ts]
    else:
        ts, tb, e2 = enc_ref.shape                                  # [ts, tb, E2]
        e_proj = jnp.dot(enc_ref[...].reshape(ts * tb, e2), we_t_ref[...],
                         preferred_element_type=jnp.float32).reshape(ts, tb, d)
        energy = jnp.tanh(e_proj + hb_ref[...])                     # f32
        scores = jnp.sum(energy * v_ref[...], axis=-1).T            # [tb, ts]

    # masked_fill(mask == 0, -1e10); padded src columns carry mask == 0.
    scores = jnp.where(mask_ref[...] == 0, jnp.float32(-1e10), scores)

    # Write this src tile's columns into the VMEM-resident score row.
    if num_src_tiles == 1:
        out_ref[...] = scores
    else:
        # Statically-unrolled, lane-aligned column stores: only the branch for
        # the current grid step executes at runtime.
        for si in range(num_src_tiles):
            @pl.when(s == si)
            def _(si=si):
                out_ref[:, si * ts:(si + 1) * ts] = scores

    # Softmax over src_len once the full row is in place.
    @pl.when(s == num_src_tiles - 1)
    def _():
        row = out_ref[...]                                          # [tb, S_pad]
        m = jnp.max(row, axis=-1, keepdims=True)
        e = jnp.exp(row - m)
        denom = jnp.sum(e, axis=-1, keepdims=True)
        out_ref[...] = e * pl.reciprocal(denom, approx=False)


def _round_up(x, m):
    return ((x + m - 1) // m) * m


def _vmem_footprint(tb, ts, s_pad, d, e2, itemsize):
    """Conservative per-step VMEM working set (bytes) for a (tb, ts) tiling."""
    enc = 2 * ts * tb * e2 * itemsize          # double-buffered encoder stream
    hid = 2 * tb * d * itemsize                # hidden blocks
    msk = 2 * tb * ts * 4                      # int32 mask tiles
    out = 2 * tb * s_pad * 4                   # resident f32 score row (x2 buffers)
    wts = 2 * ((d * d + e2 * d) * itemsize + 2 * d * 4)   # weights/bias/v (x2)
    scr = tb * d * 4                           # hidden-projection scratch
    tmp = 3 * ts * tb * d * 4                  # f32 e_proj / energy temporaries
    return enc + hid + msk + out + wts + scr + tmp


def _vmem_budget_and_cap():
    """Generation-aware tiling budget and scoped-VMEM cap.
    v5e/v6e have 128 MiB physical VMEM, v7x has 64 MiB per TensorCore."""
    try:
        phys = int(pltpu.get_tpu_info().vmem_capacity_bytes)
    except Exception:
        phys = 64 << 20                        # assume the smallest (v7x-class) VMEM
    budget = max(12 << 20, (2 * phys) // 5)    # ~25 MiB on v7x, ~51 MiB on v5e/v6e
    cap = max(32 << 20, (3 * phys) // 4)       # scoped-VMEM ceiling
    return budget, cap


def _pick_tiles(b_pad, s_pad, d, e2, itemsize, align, budget):
    # src tile: largest 128 * 2^k divisor of s_pad, capped at 512; shrink if
    # even the minimal batch tile would not fit the budget.
    ts = 128
    while s_pad % (ts * 2) == 0 and ts * 2 <= 512:
        ts *= 2
    while ts > 128 and _vmem_footprint(align, ts, s_pad, d, e2, itemsize) > budget:
        ts //= 2
    # batch tile: grow while it divides the padded batch, keeps >= 2 batch
    # grid steps (so both v7x TensorCores get work) and fits the budget.
    tb = align
    while (b_pad % (tb * 2) == 0 and b_pad // (tb * 2) >= 2
           and _vmem_footprint(tb * 2, ts, s_pad, d, e2, itemsize) <= budget):
        tb *= 2
    return tb, ts


def attention_forward(hidden, encoder_outputs, mask, w_attn, b_attn, v_w,
                      *, matmul_dtype=jnp.float32,
                      batch_tile=None, src_tile=None):
    """hidden: [B, D]; encoder_outputs: [S, B, E2] (native layout); mask: [B, S].
    w_attn: [D, E2 + D]; b_attn: [D]; v_w: [1, D].  Returns [B, S] float32."""
    src_len, batch, enc2 = encoder_outputs.shape
    dec_hid = hidden.shape[1]
    matmul_dtype = jnp.dtype(matmul_dtype)
    itemsize = matmul_dtype.itemsize

    # ---- padding: lane-dense src (x128) and sublane-aligned batch ----------
    align = 8 if itemsize >= 4 else 32 // itemsize        # 8 for f32, 16 for bf16
    b_pad = _round_up(batch, align)
    s_pad = _round_up(src_len, 128)

    # ---- parameters (concat order in the reference is (hidden, enc_out)) ---
    wh_t = w_attn[:, :dec_hid].T.astype(matmul_dtype)     # [D, D]
    we_t = w_attn[:, dec_hid:].T.astype(matmul_dtype)     # [E2, D]
    b2d = b_attn.reshape(1, dec_hid).astype(jnp.float32)  # [1, D]
    v2d = v_w.reshape(1, dec_hid).astype(jnp.float32)     # [1, D]

    # ---- activations (pad with zeros; padded mask entries are 0 == masked) -
    hidden_c = hidden.astype(matmul_dtype)
    if batch != b_pad:
        hidden_c = jnp.pad(hidden_c, ((0, b_pad - batch), (0, 0)))

    mask_i = mask.astype(jnp.int32)
    if (batch, src_len) != (b_pad, s_pad):
        mask_i = jnp.pad(mask_i, ((0, b_pad - batch), (0, s_pad - src_len)))

    enc_batch_major = matmul_dtype != encoder_outputs.dtype
    if enc_batch_major:
        # The cast already rewrites the tensor, so fold the [S,B,E2]->[B,S,E2]
        # transpose into the same HBM pass: contiguous per-step DMA slabs and
        # no per-tile [S,TB]->[TB,S] transpose inside the kernel.
        enc_c = jnp.transpose(encoder_outputs, (1, 0, 2)).astype(matmul_dtype)
        if (batch, src_len) != (b_pad, s_pad):
            enc_c = jnp.pad(enc_c, ((0, b_pad - batch), (0, s_pad - src_len), (0, 0)))
    else:
        # Native [S, B, E2] layout: no extra HBM pass over the largest tensor.
        enc_c = encoder_outputs
        if (batch, src_len) != (b_pad, s_pad):
            enc_c = jnp.pad(enc_c, ((0, s_pad - src_len), (0, b_pad - batch), (0, 0)))

    # ---- tiling -------------------------------------------------------------
    budget, vmem_cap = _vmem_budget_and_cap()
    tb, ts = _pick_tiles(b_pad, s_pad, dec_hid, enc2, itemsize, align, budget)
    if batch_tile is not None:
        tb = batch_tile
    if src_tile is not None:
        ts = src_tile
    assert b_pad % tb == 0 and (tb % align == 0 or tb == b_pad), (tb, b_pad, align)
    assert s_pad % ts == 0 and ts % 128 == 0, (ts, s_pad)

    grid = (b_pad // tb, s_pad // ts)
    num_src_tiles = grid[1]

    est = _vmem_footprint(tb, ts, s_pad, dec_hid, enc2, itemsize)
    vmem_limit = int(min(vmem_cap, max(16 << 20, 2 * est)))

    if enc_batch_major:
        enc_spec = pl.BlockSpec((tb, ts, enc2), lambda b, s: (b, s, 0))
    else:
        enc_spec = pl.BlockSpec((ts, tb, enc2), lambda b, s: (s, b, 0))

    kernel = functools.partial(_attention_kernel,
                               enc_batch_major=enc_batch_major,
                               num_src_tiles=num_src_tiles)

    out_padded = pl.pallas_call(
        kernel,
        out_shape=jax.ShapeDtypeStruct((b_pad, s_pad), jnp.float32),
        grid=grid,
        in_specs=[
            pl.BlockSpec((tb, dec_hid), lambda b, s: (b, 0)),       # hidden
            enc_spec,                                               # encoder stream
            pl.BlockSpec((tb, ts), lambda b, s: (b, s)),            # mask tile
            pl.BlockSpec((dec_hid, dec_hid), lambda b, s: (0, 0)),  # Wh^T (resident)
            pl.BlockSpec((enc2, dec_hid), lambda b, s: (0, 0)),     # We^T (resident)
            pl.BlockSpec((1, dec_hid), lambda b, s: (0, 0)),        # bias
            pl.BlockSpec((1, dec_hid), lambda b, s: (0, 0)),        # v
        ],
        out_specs=pl.BlockSpec((tb, s_pad), lambda b, s: (b, 0)),   # resident score row
        scratch_shapes=[pltpu.VMEM((tb, dec_hid), jnp.float32)],
        compiler_params=pltpu.CompilerParams(
            dimension_semantics=("parallel", "arbitrary"),
            vmem_limit_bytes=vmem_limit,
        ),
    )(hidden_c, enc_c, mask_i, wh_t, we_t, b2d, v2d)

    return out_padded[:batch, :src_len]


def attention_ref(hidden, encoder_outputs, mask, w_attn, b_attn, v_w):
    """Pure-JAX reference mirroring the PyTorch forward."""
    src_len = encoder_outputs.shape[0]
    h = jnp.repeat(hidden[:, None, :], src_len, axis=1)            # [B, S, D]
    eo = jnp.transpose(encoder_outputs, (1, 0, 2))                 # [B, S, E2]
    energy = jnp.concatenate([h, eo], axis=2)                      # [B, S, D+E2]
    energy = jnp.tanh(energy @ w_attn.T + b_attn)                  # [B, S, D]
    attn = (energy @ v_w.T)[..., 0]                                # [B, S]
    attn = jnp.where(mask == 0, -1e10, attn)
    return jax.nn.softmax(attn, axis=1)


if __name__ == "__main__":
    enc_hid_dim, dec_hid_dim = 16, 32
    enc2 = enc_hid_dim * 2

    key = jax.random.PRNGKey(0)
    k1, k2, k3, k4, k5, k6, k7 = jax.random.split(key, 7)

    # Shared parameters (Linear shapes from __init__).
    w_attn = 0.1 * jax.random.normal(k3, (dec_hid_dim, enc2 + dec_hid_dim), dtype=jnp.float32)
    b_attn = 0.1 * jax.random.normal(k4, (dec_hid_dim,), dtype=jnp.float32)
    v_w = 0.1 * jax.random.normal(k5, (1, dec_hid_dim), dtype=jnp.float32)

    # ---- small canonical shapes: batch=2, src_len=8 -------------------------
    batch, src_len = 2, 8
    hidden = jax.random.normal(k1, (batch, dec_hid_dim), dtype=jnp.float32)
    encoder_outputs = jax.random.normal(k2, (src_len, batch, enc2), dtype=jnp.float32)
    mask = jnp.ones((batch, src_len), dtype=jnp.int32)
    mask = mask.at[1, 5:].set(0)

    ref = attention_ref(hidden, encoder_outputs, mask, w_attn, b_attn, v_w)

    # f32 MXU path (native [S, B, E2] encoder layout).
    out = attention_forward(hidden, encoder_outputs, mask, w_attn, b_attn, v_w)
    out = jax.block_until_ready(out)
    assert out.shape == (batch, src_len)
    assert jnp.allclose(out, ref, rtol=5e-3, atol=1e-5), "f32 mismatch vs reference"
    assert jnp.allclose(jnp.sum(out, axis=1), 1.0, rtol=1e-5, atol=1e-5), \
        "softmax rows must sum to 1"

    # bf16 matmul path ([B, S, E2] layout folded into the unavoidable cast).
    out_bf16 = attention_forward(hidden, encoder_outputs, mask, w_attn, b_attn, v_w,
                                 matmul_dtype=jnp.bfloat16)
    out_bf16 = jax.block_until_ready(out_bf16)
    assert out_bf16.shape == (batch, src_len)
    assert jnp.allclose(out_bf16, ref, atol=3e-2), "bf16 mismatch vs reference"

    # ---- multi-tile shapes: exercises src_len tiling + resident-row epilogue,
    # batch padding and multiple batch grid steps ------------------------------
    batch2, src_len2 = 20, 300
    hidden2 = jax.random.normal(k6, (batch2, dec_hid_dim), dtype=jnp.float32)
    encoder_outputs2 = jax.random.normal(k7, (src_len2, batch2, enc2), dtype=jnp.float32)
    mask2 = jnp.ones((batch2, src_len2), dtype=jnp.int32)
    mask2 = mask2.at[3, 250:].set(0)
    mask2 = mask2.at[7, :10].set(0)

    ref2 = attention_ref(hidden2, encoder_outputs2, mask2, w_attn, b_attn, v_w)

    out2 = attention_forward(hidden2, encoder_outputs2, mask2, w_attn, b_attn, v_w)
    out2 = jax.block_until_ready(out2)
    assert out2.shape == (batch2, src_len2)
    assert jnp.allclose(out2, ref2, rtol=5e-3, atol=1e-5), "f32 multi-tile mismatch"
    assert jnp.allclose(jnp.sum(out2, axis=1), 1.0, rtol=1e-5, atol=1e-5), \
        "multi-tile softmax rows must sum to 1"

    out2_bf16 = attention_forward(hidden2, encoder_outputs2, mask2, w_attn, b_attn, v_w,
                                  matmul_dtype=jnp.bfloat16)
    out2_bf16 = jax.block_until_ready(out2_bf16)
    assert out2_bf16.shape == (batch2, src_len2)
    assert jnp.allclose(out2_bf16, ref2, atol=3e-2), "bf16 multi-tile mismatch"

    print("KERNEL_OK")
</pallas_src>

<mosaic_0001>
module attributes {stable_mosaic.version = 11 : i64} {
  func.func @_attention_kernel(%arg0: i32, %arg1: i32, %arg2: memref<8x32xf32, #tpu.memory_space<vmem>>, %arg3: memref<128x8x32xf32, #tpu.memory_space<vmem>>, %arg4: memref<8x128xi32, #tpu.memory_space<vmem>>, %arg5: memref<32x32xf32, #tpu.memory_space<vmem>>, %arg6: memref<32x32xf32, #tpu.memory_space<vmem>>, %arg7: memref<1x32xf32, #tpu.memory_space<vmem>>, %arg8: memref<1x32xf32, #tpu.memory_space<vmem>>, %arg9: memref<8x128xf32, #tpu.memory_space<vmem>>, %arg10: memref<8x32xf32, #tpu.memory_space<vmem>>) attributes {dimension_semantics = [#tpu.dimension_semantics<parallel>, #tpu.dimension_semantics<arbitrary>], iteration_bounds = array<i64: 1, 1>, scalar_prefetch = 0 : i64, scratch_operands = 1 : i64, tpu.core_type = #tpu.core_type<tc>, window_params = [{transform_indices = @transform_0, window_bounds = array<i64: 8, 32>}, {transform_indices = @transform_1, window_bounds = array<i64: 128, 8, 32>}, {transform_indices = @transform_2, window_bounds = array<i64: 8, 128>}, {pipeline_mode = #tpu.pipeline_mode<synchronous>, transform_indices = @transform_3, window_bounds = array<i64: 32, 32>}, {pipeline_mode = #tpu.pipeline_mode<synchronous>, transform_indices = @transform_4, window_bounds = array<i64: 32, 32>}, {pipeline_mode = #tpu.pipeline_mode<synchronous>, transform_indices = @transform_5, window_bounds = array<i64: 1, 32>}, {pipeline_mode = #tpu.pipeline_mode<synchronous>, transform_indices = @transform_6, window_bounds = array<i64: 1, 32>}, {transform_indices = @transform_7, window_bounds = array<i64: 8, 128>}]} {
    %c0_i32 = arith.constant 0 : i32
    %0 = arith.cmpi eq, %arg1, %c0_i32 : i32
    %1 = arith.extui %0 : i1 to i32
    %c0_i32_0 = arith.constant 0 : i32
    %2 = arith.cmpi ne, %1, %c0_i32_0 : i32
    scf.if %2 {
      %c0_18 = arith.constant 0 : index
      %c0_19 = arith.constant 0 : index
      %28 = vector.load %arg2[%c0_18, %c0_19] : memref<8x32xf32, #tpu.memory_space<vmem>>, vector<8x32xf32>
      %c0_20 = arith.constant 0 : index
      %c0_21 = arith.constant 0 : index
      %29 = vector.load %arg5[%c0_20, %c0_21] : memref<32x32xf32, #tpu.memory_space<vmem>>, vector<32x32xf32>
      %cst_22 = arith.constant dense<0.000000e+00> : vector<8x32xf32>
      %30 = tpu.matmul %28, %29, %cst_22 {dimension_numbers = #tpu.dot_dimension_numbers<[1], [0], [0], [1], [0, 0, 1, 1], [], []>} : vector<8x32xf32>, vector<32x32xf32>, vector<8x32xf32> -> vector<8x32xf32>
      %c0_23 = arith.constant 0 : index
      %c0_24 = arith.constant 0 : index
      %31 = vector.load %arg7[%c0_23, %c0_24] : memref<1x32xf32, #tpu.memory_space<vmem>>, vector<1x32xf32>
      %32 = vector.broadcast %31 : vector<1x32xf32> to vector<8x32xf32>
      %33 = arith.addf %30, %32 : vector<8x32xf32>
      %c0_25 = arith.constant 0 : index
      %c0_26 = arith.constant 0 : index
      %34 = vector.load %arg10[%c0_25, %c0_26] : memref<8x32xf32, #tpu.memory_space<vmem>>, vector<8x32xf32>
      tpu.vector_store %arg10[%c0_25, %c0_26], %33 {strides = array<i32>} : memref<8x32xf32, #tpu.memory_space<vmem>>, vector<8x32xf32>,
    } else {
    }
    %c0 = arith.constant 0 : index
    %c0_1 = arith.constant 0 : index
    %c0_2 = arith.constant 0 : index
    %3 = vector.load %arg3[%c0, %c0_1, %c0_2] : memref<128x8x32xf32, #tpu.memory_space<vmem>>, vector<128x8x32xf32>
    %4 = vector.shape_cast %3 : vector<128x8x32xf32> to vector<1024x32xf32>
    %c0_3 = arith.constant 0 : index
    %c0_4 = arith.constant 0 : index
    %5 = vector.load %arg6[%c0_3, %c0_4] : memref<32x32xf32, #tpu.memory_space<vmem>>, vector<32x32xf32>
    %cst = arith.constant dense<0.000000e+00> : vector<1024x32xf32>
    %6 = tpu.matmul %4, %5, %cst {dimension_numbers = #tpu.dot_dimension_numbers<[1], [0], [0], [1], [0, 0, 1, 1], [], []>} : vector<1024x32xf32>, vector<32x32xf32>, vector<1024x32xf32> -> vector<1024x32xf32>
    %7 = vector.shape_cast %6 : vector<1024x32xf32> to vector<128x8x32xf32>
    %c0_5 = arith.constant 0 : index
    %c0_6 = arith.constant 0 : index
    %8 = vector.load %arg10[%c0_5, %c0_6] : memref<8x32xf32, #tpu.memory_space<vmem>>, vector<8x32xf32>
    %9 = vector.shape_cast %8 : vector<8x32xf32> to vector<1x8x32xf32>
    %10 = vector.broadcast %9 : vector<1x8x32xf32> to vector<128x8x32xf32>
    %11 = arith.addf %7, %10 : vector<128x8x32xf32>
    %12 = math.tanh %11 : vector<128x8x32xf32>
    %c0_7 = arith.constant 0 : index
    %c0_8 = arith.constant 0 : index
    %13 = vector.load %arg8[%c0_7, %c0_8] : memref<1x32xf32, #tpu.memory_space<vmem>>, vector<1x32xf32>
    %14 = vector.shape_cast %13 : vector<1x32xf32> to vector<1x1x32xf32>
    %15 = vector.broadcast %14 : vector<1x1x32xf32> to vector<128x8x32xf32>
    %16 = arith.mulf %12, %15 : vector<128x8x32xf32>
    %cst_9 = arith.constant dense<0.000000e+00> : vector<128x8xf32>
    %17 = vector.multi_reduction <add>, %16, %cst_9 [2] : vector<128x8x32xf32> to vector<128x8xf32>
    %18 = tpu.transpose %17, [1, 0] : vector<128x8xf32> -> vector<8x128xf32>
    %c0_10 = arith.constant 0 : index
    %c0_11 = arith.constant 0 : index
    %19 = vector.load %arg4[%c0_10, %c0_11] : memref<8x128xi32, #tpu.memory_space<vmem>>, vector<8x128xi32>
    %c0_i32_12 = arith.constant 0 : i32
    %20 = vector.broadcast %c0_i32_12 : i32 to vector<8x128xi32>
    %21 = arith.cmpi eq, %19, %20 : vector<8x128xi32>
    %cst_13 = arith.constant -1.000000e+10 : f32
    %22 = vector.broadcast %cst_13 : f32 to vector<8x128xf32>
    %23 = arith.select %21, %22, %18 : vector<8x128xi1>, vector<8x128xf32>
    %c0_14 = arith.constant 0 : index
    %c0_15 = arith.constant 0 : index
    %24 = vector.load %arg9[%c0_14, %c0_15] : memref<8x128xf32, #tpu.memory_space<vmem>>, vector<8x128xf32>
    tpu.vector_store %arg9[%c0_14, %c0_15], %23 {strides = array<i32>} : memref<8x128xf32, #tpu.memory_space<vmem>>, vector<8x128xf32>,
    %c0_i32_16 = arith.constant 0 : i32
    %25 = arith.cmpi eq, %arg1, %c0_i32_16 : i32
    %26 = arith.extui %25 : i1 to i32
    %c0_i32_17 = arith.constant 0 : i32
    %27 = arith.cmpi ne, %26, %c0_i32_17 : i32
    scf.if %27 {
      %c0_18 = arith.constant 0 : index
      %c0_19 = arith.constant 0 : index
      %28 = vector.load %arg9[%c0_18, %c0_19] : memref<8x128xf32, #tpu.memory_space<vmem>>, vector<8x128xf32>
      %cst_20 = arith.constant dense<0xFF800000> : vector<8xf32>
      %29 = vector.multi_reduction <maximumf>, %28, %cst_20 [1] : vector<8x128xf32> to vector<8xf32>
      %30 = vector.shape_cast %29 : vector<8xf32> to vector<8x1xf32>
      %31 = vector.broadcast %30 : vector<8x1xf32> to vector<8x128xf32>
      %32 = arith.subf %28, %31 : vector<8x128xf32>
      %33 = math.exp %32 : vector<8x128xf32>
      %cst_21 = arith.constant dense<0.000000e+00> : vector<8xf32>
      %34 = vector.multi_reduction <add>, %33, %cst_21 [1] : vector<8x128xf32> to vector<8xf32>
      %35 = vector.shape_cast %34 : vector<8xf32> to vector<8x1xf32>
      %36 = tpu.reciprocal %35 : vector<8x1xf32> -> vector<8x1xf32>
      %37 = vector.broadcast %36 : vector<8x1xf32> to vector<8x128xf32>
      %38 = arith.mulf %33, %37 : vector<8x128xf32>
      %c0_22 = arith.constant 0 : index
      %c0_23 = arith.constant 0 : index
      %39 = vector.load %arg9[%c0_22, %c0_23] : memref<8x128xf32, #tpu.memory_space<vmem>>, vector<8x128xf32>
      tpu.vector_store %arg9[%c0_22, %c0_23], %38 {strides = array<i32>} : memref<8x128xf32, #tpu.memory_space<vmem>>, vector<8x128xf32>,
    } else {
    }
    return
  }
  func.func @transform_0(%arg0: i32, %arg1: i32) -> (i32, i32) {
    %c0_i32 = arith.constant 0 : i32
    %c0_i32_0 = arith.constant 0 : i32
    return %arg0, %c0_i32 : i32, i32
  }
  func.func @transform_1(%arg0: i32, %arg1: i32) -> (i32, i32, i32) {
    %c0_i32 = arith.constant 0 : i32
    %c0_i32_0 = arith.constant 0 : i32
    return %arg1, %arg0, %c0_i32 : i32, i32, i32
  }
  func.func @transform_2(%arg0: i32, %arg1: i32) -> (i32, i32) {
    %c0_i32 = arith.constant 0 : i32
    return %arg0, %arg1 : i32, i32
  }
  func.func @transform_3(%arg0: i32, %arg1: i32) -> (i32, i32) {
    %c0_i32 = arith.constant 0 : i32
    %c0_i32_0 = arith.constant 0 : i32
    %c0_i32_1 = arith.constant 0 : i32
    return %c0_i32, %c0_i32_0 : i32, i32
  }
  func.func @transform_4(%arg0: i32, %arg1: i32) -> (i32, i32) {
    %c0_i32 = arith.constant 0 : i32
    %c0_i32_0 = arith.constant 0 : i32
    %c0_i32_1 = arith.constant 0 : i32
    return %c0_i32, %c0_i32_0 : i32, i32
  }
  func.func @transform_5(%arg0: i32, %arg1: i32) -> (i32, i32) {
    %c0_i32 = arith.constant 0 : i32
    %c0_i32_0 = arith.constant 0 : i32
    %c0_i32_1 = arith.constant 0 : i32
    return %c0_i32, %c0_i32_0 : i32, i32
  }
  func.func @transform_6(%arg0: i32, %arg1: i32) -> (i32, i32) {
    %c0_i32 = arith.constant 0 : i32
    %c0_i32_0 = arith.constant 0 : i32
    %c0_i32_1 = arith.constant 0 : i32
    return %c0_i32, %c0_i32_0 : i32, i32
  }
  func.func @transform_7(%arg0: i32, %arg1: i32) -> (i32, i32) {
    %c0_i32 = arith.constant 0 : i32
    %c0_i32_0 = arith.constant 0 : i32
    return %arg0, %c0_i32 : i32, i32
  }
}

</mosaic_0001>

<llo_original>
// kernel: tpu_custom_call.1
$region0: #{tpu_custom_call.1}
  #allocation0 [shape = 'u32[]', space=smem, size = 0x4, offset = 0x4, fixed_abs, tag = 'smem constant byte address 0x4 - core index']
  #allocation1 [shape = 'u32[72,128]{1,0:T(1,128)}', space=vmem, size = 0x9000, scoped, tag = 'internal scratch']
  #allocation2 [shape = 'f32[8,32]{1,0:T(8,128)}', space=vmem, size = 0x1000, scoped, tag = 'scratch operand']
  %s0 = inlined_call_operand.vmem [shape: f32[8,32], index: 0, kind: input, shape index: {}]
  %s1 = inlined_call_operand.vmem [shape: f32[128,8,32], index: 1, kind: input, shape index: {}]
  %s2 = inlined_call_operand.vmem [shape: s32[8,128], index: 2, kind: input, shape index: {}]
  %s3 = inlined_call_operand.vmem [shape: f32[32,32], index: 3, kind: input, shape index: {}]
  %s4 = inlined_call_operand.vmem [shape: f32[32,32], index: 4, kind: input, shape index: {}]
  %s5 = inlined_call_operand.vmem [shape: f32[1,32], index: 5, kind: input, shape index: {}]
  %s6 = inlined_call_operand.vmem [shape: f32[1,32], index: 6, kind: input, shape index: {}]
  %s7 = inlined_call_operand.hbm [shape: f32[8,128], index: 7, kind: output, shape index: {}]
  %s8 = sld [smem:[#allocation0]]
  $region46: #{tpu_custom_call.1} parent=0
    _
  %s10 = ssub.s32 1, %s8
  %s11 = scalar_select 0, %s10, %s8
  $region1: #{tpu_custom_call.1} parent=0
    #allocation3 [shape = 'u8[4096]{0}', space=vmem, size = 0x1000, scoped, tag = 'output window, operand 0, single buffered']
    #allocation4 [shape = 's32[1]{0}', space=sflag, size = 0x4, scoped, tag = 'scoped memory for tpu_custom_call.1']
    %12 = vsyncpa [#allocation4], 0
    // Predicated region
    $region2: #{tpu_custom_call.1} parent=1 // pred_check
      _
    $region3: #{tpu_custom_call.1} parent=1 // pred_check_branch
      %14 = sbr.rel (0) target = $region5
    $region4: #{tpu_custom_call.1} parent=1 // pred_region
      _
    $region5: #{tpu_custom_call.1} parent=1 // pred_fallthru
      _
    // Predicated region
    $region6: #{tpu_custom_call.1} parent=1 // pred_check
      _
    $region7: #{tpu_custom_call.1} parent=1 // pred_check_branch
      %16 = sbr.rel (0) target = $region9
    $region8: #{tpu_custom_call.1} parent=1 // pred_region
      _
    $region9: #{tpu_custom_call.1} parent=1 // pred_fallthru
      _
    // Predicated region
    $region10: #{tpu_custom_call.1} parent=1 // pred_check
      _
    $region11: #{tpu_custom_call.1} parent=1 // pred_check_branch
      %18 = sbr.rel (0) target = $region13
    $region12: #{tpu_custom_call.1} parent=1 // pred_region
      _
    $region13: #{tpu_custom_call.1} parent=1 // pred_fallthru
      _
    // Predicated region
    $region14: #{tpu_custom_call.1} parent=1 // pred_check
      _
    $region15: #{tpu_custom_call.1} parent=1 // pred_check_branch
      %20 = sbr.rel (0) target = $region17
    $region16: #{tpu_custom_call.1} parent=1 // pred_region
      _
    $region17: #{tpu_custom_call.1} parent=1 // pred_fallthru
      _
    // Predicated region
    $region18: #{tpu_custom_call.1} parent=1 // pred_check
      _
    $region19: #{tpu_custom_call.1} parent=1 // pred_check_branch
      %22 = sbr.rel (0) target = $region21
    $region20: #{tpu_custom_call.1} parent=1 // pred_region
      _
    $region21: #{tpu_custom_call.1} parent=1 // pred_fallthru
      _
    // Predicated region
    $region22: #{tpu_custom_call.1} parent=1 // pred_check
      _
    $region23: #{tpu_custom_call.1} parent=1 // pred_check_branch
      %24 = sbr.rel (0) target = $region25
    $region24: #{tpu_custom_call.1} parent=1 // pred_region
      _
    $region25: #{tpu_custom_call.1} parent=1 // pred_fallthru
      _
    // Predicated region
    $region26: #{tpu_custom_call.1} parent=1 // pred_check
      _
    $region27: #{tpu_custom_call.1} parent=1 // pred_check_branch
      %26 = sbr.rel (0) target = $region29
    $region28: #{tpu_custom_call.1} parent=1 // pred_region
      _
    $region29: #{tpu_custom_call.1} parent=1 // pred_fallthru
      _
    %p27 = scmp.eq.s32.totalorder 0, 0
    // Predicated region
    $region30: #{tpu_custom_call.1} parent=1 // pred_check
      %p28 = pneg %p27
    $region31: #{tpu_custom_call.1} parent=1 // pred_check_branch
      %30 = sbr.rel (%p28) target = $region33
    $region32: #{tpu_custom_call.1} parent=1 // pred_region
      %v31 = vld [vmem:[%s0] sm:$0xff]
      %v32 = vld [vmem:[%s3] sm:$0xff]
      %v33 = vld [vmem:[%s3 + $0x8] sm:$0xff]
      %v34 = vld [vmem:[%s3 + $0x10] sm:$0xff]
      %v35 = vld [vmem:[%s3 + $0x18] sm:$0xff]
      %v36 = vld [vmem:[%s5] sm:$0x1]
      %v38 = vperm.slane %v36, 0
      %vm40 = vcmask 261120
      %v42 = vsel %vm40, %v31, 0
      %44 = vmatpush.msra.mxu0 0.0
      %45 = vmatpush.msra.mxu0 0.0
      %46 = vmatpush.msra.mxu0 0.0
      %47 = vmatpush.msra.mxu0 0.0
      %48 = vmatpush.msra.mxu0 0.0
      %49 = vmatpush.msra.mxu0 0.0
      %50 = vmatpush.msra.mxu0 0.0
      %51 = vmatpush.msra.mxu0 0.0
      %52 = vmatpush.msra.mxu0 0.0
      %53 = vmatpush.msra.mxu0 0.0
      %54 = vmatpush.msra.mxu0 0.0
      %55 = vmatpush.msra.mxu0 0.0
      %56 = vmatpush.msra.mxu0 %v35
      %57 = vmatpush.msra.mxu0 %v34
      %58 = vmatpush.msra.mxu0 %v33
      %59 = vmatpush.msra.mxu0 %v32
      %60 = vmatmul.f32.gmra.mxu0 %v42
      %v61 = vpop.f32.mrf.mxu0
      %v62 = vadd.f32 %v38, %v61
      %63 = vdwg.mxu0
      %64 = vst.msk [vmem:[#allocation2] sm:$0xff] %vm40, %v62
    $region33: #{tpu_custom_call.1} parent=1 // pred_fallthru
      _
    %v65 = vld [vmem:[%s1] sm:$0xff]
    %v66 = vld [vmem:[%s1 + $0x8] sm:$0xff]
    %v67 = vld [vmem:[%s1 + $0x10] sm:$0xff]
    %v68 = vld [vmem:[%s1 + $0x18] sm:$0xff]
    %v69 = vld [vmem:[%s1 + $0x20] sm:$0xff]
    %v70 = vld [vmem:[%s1 + $0x28] sm:$0xff]
    %v71 = vld [vmem:[%s1 + $0x30] sm:$0xff]
    %v72 = vld [vmem:[%s1 + $0x38] sm:$0xff]
    %v73 = vld [vmem:[%s1 + $0x40] sm:$0xff]
    %v74 = vld [vmem:[%s1 + $0x48] sm:$0xff]
    %v75 = vld [vmem:[%s1 + $0x50] sm:$0xff]
    %v76 = vld [vmem:[%s1 + $0x58] sm:$0xff]
    %v77 = vld [vmem:[%s1 + $0x60] sm:$0xff]
    %v78 = vld [vmem:[%s1 + $0x68] sm:$0xff]
    %v79 = vld [vmem:[%s1 + $0x70] sm:$0xff]
    %v80 = vld [vmem:[%s1 + $0x78] sm:$0xff]
    %v81 = vld [vmem:[%s1 + $0x80] sm:$0xff]
    %v82 = vld [vmem:[%s1 + $0x88] sm:$0xff]
    %v83 = vld [vmem:[%s1 + $0x90] sm:$0xff]
    %v84 = vld [vmem:[%s1 + $0x98] sm:$0xff]
    %v85 = vld [vmem:[%s1 + $0xa0] sm:$0xff]
    %v86 = vld [vmem:[%s1 + $0xa8] sm:$0xff]
    %v87 = vld [vmem:[%s1 + $0xb0] sm:$0xff]
    %v88 = vld [vmem:[%s1 + $0xb8] sm:$0xff]
    %v89 = vld [vmem:[%s1 + $0xc0] sm:$0xff]
    %v90 = vld [vmem:[%s1 + $0xc8] sm:$0xff]
    %v91 = vld [vmem:[%s1 + $0xd0] sm:$0xff]
    %v92 = vld [vmem:[%s1 + $0xd8] sm:$0xff]
    %v93 = vld [vmem:[%s1 + $0xe0] sm:$0xff]
    %v94 = vld [vmem:[%s1 + $0xe8] sm:$0xff]
    %v95 = vld [vmem:[%s1 + $0xf0] sm:$0xff]
    %v96 = vld [vmem:[%s1 + $0xf8] sm:$0xff]
    %v97 = vld [vmem:[%s1 + $0x100] sm:$0xff]
    %v98 = vld [vmem:[%s1 + $0x108] sm:$0xff]
    %v99 = vld [vmem:[%s1 + $0x110] sm:$0xff]
    %v100 = vld [vmem:[%s1 + $0x118] sm:$0xff]
    %v101 = vld [vmem:[%s1 + $0x120] sm:$0xff]
    %v102 = vld [vmem:[%s1 + $0x128] sm:$0xff]
    %v103 = vld [vmem:[%s1 + $0x130] sm:$0xff]
    %v104 = vld [vmem:[%s1 + $0x138] sm:$0xff]
    %v105 = vld [vmem:[%s1 + $0x140] sm:$0xff]
    %v106 = vld [vmem:[%s1 + $0x148] sm:$0xff]
    %v107 = vld [vmem:[%s1 + $0x150] sm:$0xff]
    %v108 = vld [vmem:[%s1 + $0x158] sm:$0xff]
    %v109 = vld [vmem:[%s1 + $0x160] sm:$0xff]
    %v110 = vld [vmem:[%s1 + $0x168] sm:$0xff]
    %v111 = vld [vmem:[%s1 + $0x170] sm:$0xff]
    %v112 = vld [vmem:[%s1 + $0x178] sm:$0xff]
    %v113 = vld [vmem:[%s1 + $0x180] sm:$0xff]
    %v114 = vld [vmem:[%s1 + $0x188] sm:$0xff]
    %v115 = vld [vmem:[%s1 + $0x190] sm:$0xff]
    %v116 = vld [vmem:[%s1 + $0x198] sm:$0xff]
    %v117 = vld [vmem:[%s1 + $0x1a0] sm:$0xff]
    %v118 = vld [vmem:[%s1 + $0x1a8] sm:$0xff]
    %v119 = vld [vmem:[%s1 + $0x1b0] sm:$0xff]
    %v120 = vld [vmem:[%s1 + $0x1b8] sm:$0xff]
    %v121 = vld [vmem:[%s1 + $0x1c0] sm:$0xff]
    %v122 = vld [vmem:[%s1 + $0x1c8] sm:$0xff]
    %v123 = vld [vmem:[%s1 + $0x1d0] sm:$0xff]
    %v124 = vld [vmem:[%s1 + $0x1d8] sm:$0xff]
    %v125 = vld [vmem:[%s1 + $0x1e0] sm:$0xff]
    %v126 = vld [vmem:[%s1 + $0x1e8] sm:$0xff]
    %v127 = vld [vmem:[%s1 + $0x1f0] sm:$0xff]
    %v128 = vld [vmem:[%s1 + $0x1f8] sm:$0xff]
    %v129 = vld [vmem:[%s1 + $0x200] sm:$0xff]
    %v130 = vld [vmem:[%s1 + $0x208] sm:$0xff]
    %v131 = vld [vmem:[%s1 + $0x210] sm:$0xff]
    %v132 = vld [vmem:[%s1 + $0x218] sm:$0xff]
    %v133 = vld [vmem:[%s1 + $0x220] sm:$0xff]
    %v134 = vld [vmem:[%s1 + $0x228] sm:$0xff]
    %v135 = vld [vmem:[%s1 + $0x230] sm:$0xff]
    %v136 = vld [vmem:[%s1 + $0x238] sm:$0xff]
    %v137 = vld [vmem:[%s1 + $0x240] sm:$0xff]
    %v138 = vld [vmem:[%s1 + $0x248] sm:$0xff]
    %v139 = vld [vmem:[%s1 + $0x250] sm:$0xff]
    %v140 = vld [vmem:[%s1 + $0x258] sm:$0xff]
    %v141 = vld [vmem:[%s1 + $0x260] sm:$0xff]
    %v142 = vld [vmem:[%s1 + $0x268] sm:$0xff]
    %v143 = vld [vmem:[%s1 + $0x270] sm:$0xff]
    %v144 = vld [vmem:[%s1 + $0x278] sm:$0xff]
    %v145 = vld [vmem:[%s1 + $0x280] sm:$0xff]
    %v146 = vld [vmem:[%s1 + $0x288] sm:$0xff]
    %v147 = vld [vmem:[%s1 + $0x290] sm:$0xff]
    %v148 = vld [vmem:[%s1 + $0x298] sm:$0xff]
    %v149 = vld [vmem:[%s1 + $0x2a0] sm:$0xff]
    %v150 = vld [vmem:[%s1 + $0x2a8] sm:$0xff]
    %v151 = vld [vmem:[%s1 + $0x2b0] sm:$0xff]
    %v152 = vld [vmem:[%s1 + $0x2b8] sm:$0xff]
    %v153 = vld [vmem:[%s1 + $0x2c0] sm:$0xff]
    %v154 = vld [vmem:[%s1 + $0x2c8] sm:$0xff]
    %v155 = vld [vmem:[%s1 + $0x2d0] sm:$0xff]
    %v156 = vld [vmem:[%s1 + $0x2d8] sm:$0xff]
    %v157 = vld [vmem:[%s1 + $0x2e0] sm:$0xff]
    %v158 = vld [vmem:[%s1 + $0x2e8] sm:$0xff]
    %v159 = vld [vmem:[%s1 + $0x2f0] sm:$0xff]
    %v160 = vld [vmem:[%s1 + $0x2f8] sm:$0xff]
    %v161 = vld [vmem:[%s1 + $0x300] sm:$0xff]
    %v162 = vld [vmem:[%s1 + $0x308] sm:$0xff]
    %v163 = vld [vmem:[%s1 + $0x310] sm:$0xff]
    %v164 = vld [vmem:[%s1 + $0x318] sm:$0xff]
    %v165 = vld [vmem:[%s1 + $0x320] sm:$0xff]
    %v166 = vld [vmem:[%s1 + $0x328] sm:$0xff]
    %v167 = vld [vmem:[%s1 + $0x330] sm:$0xff]
    %v168 = vld [vmem:[%s1 + $0x338] sm:$0xff]
    %v169 = vld [vmem:[%s1 + $0x340] sm:$0xff]
    %v170 = vld [vmem:[%s1 + $0x348] sm:$0xff]
    %v171 = vld [vmem:[%s1 + $0x350] sm:$0xff]
    %v172 = vld [vmem:[%s1 + $0x358] sm:$0xff]
    %v173 = vld [vmem:[%s1 + $0x360] sm:$0xff]
    %v174 = vld [vmem:[%s1 + $0x368] sm:$0xff]
    %v175 = vld [vmem:[%s1 + $0x370] sm:$0xff]
    %v176 = vld [vmem:[%s1 + $0x378] sm:$0xff]
    %v177 = vld [vmem:[%s1 + $0x380] sm:$0xff]
    %v178 = vld [vmem:[%s1 + $0x388] sm:$0xff]
    %v179 = vld [vmem:[%s1 + $0x390] sm:$0xff]
    %v180 = vld [vmem:[%s1 + $0x398] sm:$0xff]
    %v181 = vld [vmem:[%s1 + $0x3a0] sm:$0xff]
    %v182 = vld [vmem:[%s1 + $0x3a8] sm:$0xff]
    %v183 = vld [vmem:[%s1 + $0x3b0] sm:$0xff]
    %v184 = vld [vmem:[%s1 + $0x3b8] sm:$0xff]
    %v185 = vld [vmem:[%s1 + $0x3c0] sm:$0xff]
    %v186 = vld [vmem:[%s1 + $0x3c8] sm:$0xff]
    %v187 = vld [vmem:[%s1 + $0x3d0] sm:$0xff]
    %v188 = vld [vmem:[%s1 + $0x3d8] sm:$0xff]
    %v189 = vld [vmem:[%s1 + $0x3e0] sm:$0xff]
    %v190 = vld [vmem:[%s1 + $0x3e8] sm:$0xff]
    %v191 = vld [vmem:[%s1 + $0x3f0] sm:$0xff]
    %v192 = vld [vmem:[%s1 + $0x3f8] sm:$0xff]
    %v193 = vld [vmem:[%s4] sm:$0xff]
    %v194 = vld [vmem:[%s4 + $0x8] sm:$0xff]
    %v195 = vld [vmem:[%s4 + $0x10] sm:$0xff]
    %v196 = vld [vmem:[%s4 + $0x18] sm:$0xff]
    %vm197 = vcmask 261120
    %v199 = vsel %vm197, %v65, 0
    %v202 = vsel %vm197, %v66, 0
    %v205 = vsel %vm197, %v67, 0
    %v208 = vsel %vm197, %v68, 0
    %v211 = vsel %vm197, %v69, 0
    %v214 = vsel %vm197, %v70, 0
    %v217 = vsel %vm197, %v71, 0
    %v220 = vsel %vm197, %v72, 0
    %v223 = vsel %vm197, %v73, 0
    %v226 = vsel %vm197, %v74, 0
    %v229 = vsel %vm197, %v75, 0
    %v232 = vsel %vm197, %v76, 0
    %v235 = vsel %vm197, %v77, 0
    %v238 = vsel %vm197, %v78, 0
    %v241 = vsel %vm197, %v79, 0
    %v244 = vsel %vm197, %v80, 0
    %v247 = vsel %vm197, %v81, 0
    %v250 = vsel %vm197, %v82, 0
    %v253 = vsel %vm197, %v83, 0
    %v256 = vsel %vm197, %v84, 0
    %v259 = vsel %vm197, %v85, 0
    %v262 = vsel %vm197, %v86, 0
    %v265 = vsel %vm197, %v87, 0
    %v268 = vsel %vm197, %v88, 0
    %v271 = vsel %vm197, %v89, 0
    %v274 = vsel %vm197, %v90, 0
    %v277 = vsel %vm197, %v91, 0
    %v280 = vsel %vm197, %v92, 0
    %v283 = vsel %vm197, %v93, 0
    %v286 = vsel %vm197, %v94, 0
    %v289 = vsel %vm197, %v95, 0
    %v292 = vsel %vm197, %v96, 0
    %v295 = vsel %vm197, %v97, 0
    %v298 = vsel %vm197, %v98, 0
    %v301 = vsel %vm197, %v99, 0
    %v304 = vsel %vm197, %v100, 0
    %v307 = vsel %vm197, %v101, 0
    %v310 = vsel %vm197, %v102, 0
    %v313 = vsel %vm197, %v103, 0
    %v316 = vsel %vm197, %v104, 0
    %v319 = vsel %vm197, %v105, 0
    %v322 = vsel %vm197, %v106, 0
    %v325 = vsel %vm197, %v107, 0
    %v328 = vsel %vm197, %v108, 0
    %v331 = vsel %vm197, %v109, 0
    %v334 = vsel %vm197, %v110, 0
    %v337 = vsel %vm197, %v111, 0
    %v340 = vsel %vm197, %v112, 0
    %v343 = vsel %vm197, %v113, 0
    %v346 = vsel %vm197, %v114, 0
    %v349 = vsel %vm197, %v115, 0
    %v352 = vsel %vm197, %v116, 0
    %v355 = vsel %vm197, %v117, 0
    %v358 = vsel %vm197, %v118, 0
    %v361 = vsel %vm197, %v119, 0
    %v364 = vsel %vm197, %v120, 0
    %v367 = vsel %vm197, %v121, 0
    %v370 = vsel %vm197, %v122, 0
    %v373 = vsel %vm197, %v123, 0
    %v376 = vsel %vm197, %v124, 0
    %v379 = vsel %vm197, %v125, 0
    %v382 = vsel %vm197, %v126, 0
    %v385 = vsel %vm197, %v127, 0
    %v388 = vsel %vm197, %v128, 0
    %v391 = vsel %vm197, %v129, 0
    %v394 = vsel %vm197, %v130, 0
    %v397 = vsel %vm197, %v131, 0
    %v400 = vsel %vm197, %v132, 0
    %v403 = vsel %vm197, %v133, 0
    %v406 = vsel %vm197, %v134, 0
    %v409 = vsel %vm197, %v135, 0
    %v412 = vsel %vm197, %v136, 0
    %v415 = vsel %vm197, %v137, 0
    %v418 = vsel %vm197, %v138, 0
    %v421 = vsel %vm197, %v139, 0
    %v424 = vsel %vm197, %v140, 0
    %v427 = vsel %vm197, %v141, 0
    %v430 = vsel %vm197, %v142, 0
    %v433 = vsel %vm197, %v143, 0
    %v436 = vsel %vm197, %v144, 0
    %v439 = vsel %vm197, %v145, 0
    %v442 = vsel %vm197, %v146, 0
    %v445 = vsel %vm197, %v147, 0
    %v448 = vsel %vm197, %v148, 0
    %v451 = vsel %vm197, %v149, 0
    %v454 = vsel %vm197, %v150, 0
    %v457 = vsel %vm197, %v151, 0
    %v460 = vsel %vm197, %v152, 0
    %v463 = vsel %vm197, %v153, 0
    %v466 = vsel %vm197, %v154, 0
    %v469 = vsel %vm197, %v155, 0
    %v472 = vsel %vm197, %v156, 0
    %v475 = vsel %vm197, %v157, 0
    %v478 = vsel %vm197, %v158, 0
    %v481 = vsel %vm197, %v159, 0
    %v484 = vsel %vm197, %v160, 0
    %v487 = vsel %vm197, %v161, 0
    %v490 = vsel %vm197, %v162, 0
    %v493 = vsel %vm197, %v163, 0
    %v496 = vsel %vm197, %v164, 0
    %v499 = vsel %vm197, %v165, 0
    %v502 = vsel %vm197, %v166, 0
    %v505 = vsel %vm197, %v167, 0
    %v508 = vsel %vm197, %v168, 0
    %v511 = vsel %vm197, %v169, 0
    %v514 = vsel %vm197, %v170, 0
    %v517 = vsel %vm197, %v171, 0
    %v520 = vsel %vm197, %v172, 0
    %v523 = vsel %vm197, %v173, 0
    %v526 = vsel %vm197, %v174, 0
    %v529 = vsel %vm197, %v175, 0
    %v532 = vsel %vm197, %v176, 0
    %v535 = vsel %vm197, %v177, 0
    %v538 = vsel %vm197, %v178, 0
    %v541 = vsel %vm197, %v179, 0
    %v544 = vsel %vm197, %v180, 0
    %v547 = vsel %vm197, %v181, 0
    %v550 = vsel %vm197, %v182, 0
    %v553 = vsel %vm197, %v183, 0
    %v556 = vsel %vm197, %v184, 0
    %v559 = vsel %vm197, %v185, 0
    %v562 = vsel %vm197, %v186, 0
    %v565 = vsel %vm197, %v187, 0
    %v568 = vsel %vm197, %v188, 0
    %v571 = vsel %vm197, %v189, 0
    %v574 = vsel %vm197, %v190, 0
    %v577 = vsel %vm197, %v191, 0
    %v580 = vsel %vm197, %v192, 0
    %582 = vmatpush.msra.mxu0 0.0
    %583 = vmatpush.msra.mxu0 0.0
    %584 = vmatpush.msra.mxu0 0.0
    %585 = vmatpush.msra.mxu0 0.0
    %586 = vmatpush.msra.mxu0 0.0
    %587 = vmatpush.msra.mxu0 0.0
    %588 = vmatpush.msra.mxu0 0.0
    %589 = vmatpush.msra.mxu0 0.0
    %590 = vmatpush.msra.mxu0 0.0
    %591 = vmatpush.msra.mxu0 0.0
    %592 = vmatpush.msra.mxu0 0.0
    %593 = vmatpush.msra.mxu0 0.0
    %594 = vmatpush.msra.mxu0 %v196
    %595 = vmatpush.msra.mxu0 %v195
    %596 = vmatpush.msra.mxu0 %v194
    %597 = vmatpush.msra.mxu0 %v193
    %598 = vmatmul.f32.gmra.mxu0 %v199
    %v599 = vpop.f32.mrf.mxu0
    %v600 = vadd.f32 0.0, %v599
    %601 = vmatmul.f32.gmra.mxu0 %v202
    %v602 = vpop.f32.mrf.mxu0
    %v603 = vadd.f32 0.0, %v602
    %604 = vmatmul.f32.gmra.mxu0 %v205
    %v605 = vpop.f32.mrf.mxu0
    %v606 = vadd.f32 0.0, %v605
    %607 = vmatmul.f32.gmra.mxu0 %v208
    %v608 = vpop.f32.mrf.mxu0
    %v609 = vadd.f32 0.0, %v608
    %610 = vmatmul.f32.gmra.mxu0 %v211
    %v611 = vpop.f32.mrf.mxu0
    %v612 = vadd.f32 0.0, %v611
    %613 = vmatmul.f32.gmra.mxu0 %v214
    %v614 = vpop.f32.mrf.mxu0
    %v615 = vadd.f32 0.0, %v614
    %616 = vmatmul.f32.gmra.mxu0 %v217
    %v617 = vpop.f32.mrf.mxu0
    %v618 = vadd.f32 0.0, %v617
    %619 = vmatmul.f32.gmra.mxu0 %v220
    %v620 = vpop.f32.mrf.mxu0
    %v621 = vadd.f32 0.0, %v620
    %622 = vmatmul.f32.gmra.mxu0 %v223
    %v623 = vpop.f32.mrf.mxu0
    %v624 = vadd.f32 0.0, %v623
    %625 = vmatmul.f32.gmra.mxu0 %v226
    %v626 = vpop.f32.mrf.mxu0
    %v627 = vadd.f32 0.0, %v626
    %628 = vmatmul.f32.gmra.mxu0 %v229
    %v629 = vpop.f32.mrf.mxu0
    %v630 = vadd.f32 0.0, %v629
    %631 = vmatmul.f32.gmra.mxu0 %v232
    %v632 = vpop.f32.mrf.mxu0
    %v633 = vadd.f32 0.0, %v632
    %634 = vmatmul.f32.gmra.mxu0 %v235
    %v635 = vpop.f32.mrf.mxu0
    %v636 = vadd.f32 0.0, %v635
    %637 = vmatmul.f32.gmra.mxu0 %v238
    %v638 = vpop.f32.mrf.mxu0
    %v639 = vadd.f32 0.0, %v638
    %640 = vmatmul.f32.gmra.mxu0 %v241
    %v641 = vpop.f32.mrf.mxu0
    %v642 = vadd.f32 0.0, %v641
    %643 = vmatmul.f32.gmra.mxu0 %v244
    %v644 = vpop.f32.mrf.mxu0
    %v645 = vadd.f32 0.0, %v644
    %646 = vmatmul.f32.gmra.mxu0 %v247
    %v647 = vpop.f32.mrf.mxu0
    %v648 = vadd.f32 0.0, %v647
    %649 = vmatmul.f32.gmra.mxu0 %v250
    %v650 = vpop.f32.mrf.mxu0
    %v651 = vadd.f32 0.0, %v650
    %652 = vmatmul.f32.gmra.mxu0 %v253
    %v653 = vpop.f32.mrf.mxu0
    %v654 = vadd.f32 0.0, %v653
    %655 = vmatmul.f32.gmra.mxu0 %v256
    %v656 = vpop.f32.mrf.mxu0
    %v657 = vadd.f32 0.0, %v656
    %658 = vmatmul.f32.gmra.mxu0 %v259
    %v659 = vpop.f32.mrf.mxu0
    %v660 = vadd.f32 0.0, %v659
    %661 = vmatmul.f32.gmra.mxu0 %v262
    %v662 = vpop.f32.mrf.mxu0
    %v663 = vadd.f32 0.0, %v662
    %664 = vmatmul.f32.gmra.mxu0 %v265
    %v665 = vpop.f32.mrf.mxu0
    %v666 = vadd.f32 0.0, %v665
    %667 = vmatmul.f32.gmra.mxu0 %v268
    %v668 = vpop.f32.mrf.mxu0
    %v669 = vadd.f32 0.0, %v668
    %670 = vmatmul.f32.gmra.mxu0 %v271
    %v671 = vpop.f32.mrf.mxu0
    %v672 = vadd.f32 0.0, %v671
    %673 = vmatmul.f32.gmra.mxu0 %v274
    %v674 = vpop.f32.mrf.mxu0
    %v675 = vadd.f32 0.0, %v674
    %676 = vmatmul.f32.gmra.mxu0 %v277
    %v677 = vpop.f32.mrf.mxu0
    %v678 = vadd.f32 0.0, %v677
    %679 = vmatmul.f32.gmra.mxu0 %v280
    %v680 = vpop.f32.mrf.mxu0
    %v681 = vadd.f32 0.0, %v680
    %682 = vmatmul.f32.gmra.mxu0 %v283
    %v683 = vpop.f32.mrf.mxu0
    %v684 = vadd.f32 0.0, %v683
    %685 = vmatmul.f32.gmra.mxu0 %v286
    %v686 = vpop.f32.mrf.mxu0
    %v687 = vadd.f32 0.0, %v686
    %688 = vmatmul.f32.gmra.mxu0 %v289
    %v689 = vpop.f32.mrf.mxu0
    %v690 = vadd.f32 0.0, %v689
    %691 = vmatmul.f32.gmra.mxu0 %v292
    %v692 = vpop.f32.mrf.mxu0
    %v693 = vadd.f32 0.0, %v692
    %694 = vmatmul.f32.gmra.mxu0 %v295
    %v695 = vpop.f32.mrf.mxu0
    %v696 = vadd.f32 0.0, %v695
    %697 = vmatmul.f32.gmra.mxu0 %v298
    %v698 = vpop.f32.mrf.mxu0
    %v699 = vadd.f32 0.0, %v698
    %700 = vmatmul.f32.gmra.mxu0 %v301
    %v701 = vpop.f32.mrf.mxu0
    %v702 = vadd.f32 0.0, %v701
    %703 = vmatmul.f32.gmra.mxu0 %v304
    %v704 = vpop.f32.mrf.mxu0
    %v705 = vadd.f32 0.0, %v704
    %706 = vmatmul.f32.gmra.mxu0 %v307
    %v707 = vpop.f32.mrf.mxu0
    %v708 = vadd.f32 0.0, %v707
    %709 = vmatmul.f32.gmra.mxu0 %v310
    %v710 = vpop.f32.mrf.mxu0
    %v711 = vadd.f32 0.0, %v710
    %712 = vmatmul.f32.gmra.mxu0 %v313
    %v713 = vpop.f32.mrf.mxu0
    %v714 = vadd.f32 0.0, %v713
    %715 = vmatmul.f32.gmra.mxu0 %v316
    %v716 = vpop.f32.mrf.mxu0
    %v717 = vadd.f32 0.0, %v716
    %718 = vmatmul.f32.gmra.mxu0 %v319
    %v719 = vpop.f32.mrf.mxu0
    %v720 = vadd.f32 0.0, %v719
    %721 = vmatmul.f32.gmra.mxu0 %v322
    %v722 = vpop.f32.mrf.mxu0
    %v723 = vadd.f32 0.0, %v722
    %724 = vmatmul.f32.gmra.mxu0 %v325
    %v725 = vpop.f32.mrf.mxu0
    %v726 = vadd.f32 0.0, %v725
    %727 = vmatmul.f32.gmra.mxu0 %v328
    %v728 = vpop.f32.mrf.mxu0
    %v729 = vadd.f32 0.0, %v728
    %730 = vmatmul.f32.gmra.mxu0 %v331
    %v731 = vpop.f32.mrf.mxu0
    %v732 = vadd.f32 0.0, %v731
    %733 = vmatmul.f32.gmra.mxu0 %v334
    %v734 = vpop.f32.mrf.mxu0
    %v735 = vadd.f32 0.0, %v734
    %736 = vmatmul.f32.gmra.mxu0 %v337
    %v737 = vpop.f32.mrf.mxu0
    %v738 = vadd.f32 0.0, %v737
    %739 = vmatmul.f32.gmra.mxu0 %v340
    %v740 = vpop.f32.mrf.mxu0
    %v741 = vadd.f32 0.0, %v740
    %742 = vmatmul.f32.gmra.mxu0 %v343
    %v743 = vpop.f32.mrf.mxu0
    %v744 = vadd.f32 0.0, %v743
    %745 = vmatmul.f32.gmra.mxu0 %v346
    %v746 = vpop.f32.mrf.mxu0
    %v747 = vadd.f32 0.0, %v746
    %748 = vmatmul.f32.gmra.mxu0 %v349
    %v749 = vpop.f32.mrf.mxu0
    %v750 = vadd.f32 0.0, %v749
    %751 = vmatmul.f32.gmra.mxu0 %v352
    %v752 = vpop.f32.mrf.mxu0
    %v753 = vadd.f32 0.0, %v752
    %754 = vmatmul.f32.gmra.mxu0 %v355
    %v755 = vpop.f32.mrf.mxu0
    %v756 = vadd.f32 0.0, %v755
    %757 = vmatmul.f32.gmra.mxu0 %v358
    %v758 = vpop.f32.mrf.mxu0
    %v759 = vadd.f32 0.0, %v758
    %760 = vmatmul.f32.gmra.mxu0 %v361
    %v761 = vpop.f32.mrf.mxu0
    %v762 = vadd.f32 0.0, %v761
    %763 = vmatmul.f32.gmra.mxu0 %v364
    %v764 = vpop.f32.mrf.mxu0
    %v765 = vadd.f32 0.0, %v764
    %766 = vmatmul.f32.gmra.mxu0 %v367
    %v767 = vpop.f32.mrf.mxu0
    %v768 = vadd.f32 0.0, %v767
    %769 = vmatmul.f32.gmra.mxu0 %v370
    %v770 = vpop.f32.mrf.mxu0
    %v771 = vadd.f32 0.0, %v770
    %772 = vmatmul.f32.gmra.mxu0 %v373
    %v773 = vpop.f32.mrf.mxu0
    %v774 = vadd.f32 0.0, %v773
    %775 = vmatmul.f32.gmra.mxu0 %v376
    %v776 = vpop.f32.mrf.mxu0
    %v777 = vadd.f32 0.0, %v776
    %778 = vmatmul.f32.gmra.mxu0 %v379
    %v779 = vpop.f32.mrf.mxu0
    %v780 = vadd.f32 0.0, %v779
    %781 = vmatmul.f32.gmra.mxu0 %v382
    %v782 = vpop.f32.mrf.mxu0
    %v783 = vadd.f32 0.0, %v782
    %784 = vmatmul.f32.gmra.mxu0 %v385
    %v785 = vpop.f32.mrf.mxu0
    %v786 = vadd.f32 0.0, %v785
    %787 = vmatmul.f32.gmra.mxu0 %v388
    %v788 = vpop.f32.mrf.mxu0
    %v789 = vadd.f32 0.0, %v788
    %790 = vmatmul.f32.gmra.mxu0 %v391
    %v791 = vpop.f32.mrf.mxu0
    %v792 = vadd.f32 0.0, %v791
    %793 = vmatmul.f32.gmra.mxu0 %v394
    %v794 = vpop.f32.mrf.mxu0
    %v795 = vadd.f32 0.0, %v794
    %796 = vmatmul.f32.gmra.mxu0 %v397
    %v797 = vpop.f32.mrf.mxu0
    %v798 = vadd.f32 0.0, %v797
    %799 = vmatmul.f32.gmra.mxu0 %v400
    %v800 = vpop.f32.mrf.mxu0
    %v801 = vadd.f32 0.0, %v800
    %802 = vmatmul.f32.gmra.mxu0 %v403
    %v803 = vpop.f32.mrf.mxu0
    %v804 = vadd.f32 0.0, %v803
    %805 = vmatmul.f32.gmra.mxu0 %v406
    %v806 = vpop.f32.mrf.mxu0
    %v807 = vadd.f32 0.0, %v806
    %808 = vmatmul.f32.gmra.mxu0 %v409
    %v809 = vpop.f32.mrf.mxu0
    %v810 = vadd.f32 0.0, %v809
    %811 = vmatmul.f32.gmra.mxu0 %v412
    %v812 = vpop.f32.mrf.mxu0
    %v813 = vadd.f32 0.0, %v812
    %814 = vmatmul.f32.gmra.mxu0 %v415
    %v815 = vpop.f32.mrf.mxu0
    %v816 = vadd.f32 0.0, %v815
    %817 = vmatmul.f32.gmra.mxu0 %v418
    %v818 = vpop.f32.mrf.mxu0
    %v819 = vadd.f32 0.0, %v818
    %820 = vmatmul.f32.gmra.mxu0 %v421
    %v821 = vpop.f32.mrf.mxu0
    %v822 = vadd.f32 0.0, %v821
    %823 = vmatmul.f32.gmra.mxu0 %v424
    %v824 = vpop.f32.mrf.mxu0
    %v825 = vadd.f32 0.0, %v824
    %826 = vmatmul.f32.gmra.mxu0 %v427
    %v827 = vpop.f32.mrf.mxu0
    %v828 = vadd.f32 0.0, %v827
    %829 = vmatmul.f32.gmra.mxu0 %v430
    %v830 = vpop.f32.mrf.mxu0
    %v831 = vadd.f32 0.0, %v830
    %832 = vmatmul.f32.gmra.mxu0 %v433
    %v833 = vpop.f32.mrf.mxu0
    %v834 = vadd.f32 0.0, %v833
    %835 = vmatmul.f32.gmra.mxu0 %v436
    %v836 = vpop.f32.mrf.mxu0
    %v837 = vadd.f32 0.0, %v836
    %838 = vmatmul.f32.gmra.mxu0 %v439
    %v839 = vpop.f32.mrf.mxu0
    %v840 = vadd.f32 0.0, %v839
    %841 = vmatmul.f32.gmra.mxu0 %v442
    %v842 = vpop.f32.mrf.mxu0
    %v843 = vadd.f32 0.0, %v842
    %844 = vmatmul.f32.gmra.mxu0 %v445
    %v845 = vpop.f32.mrf.mxu0
    %v846 = vadd.f32 0.0, %v845
    %847 = vmatmul.f32.gmra.mxu0 %v448
    %v848 = vpop.f32.mrf.mxu0
    %v849 = vadd.f32 0.0, %v848
    %850 = vmatmul.f32.gmra.mxu0 %v451
    %v851 = vpop.f32.mrf.mxu0
    %v852 = vadd.f32 0.0, %v851
    %853 = vmatmul.f32.gmra.mxu0 %v454
    %v854 = vpop.f32.mrf.mxu0
    %v855 = vadd.f32 0.0, %v854
    %856 = vmatmul.f32.gmra.mxu0 %v457
    %v857 = vpop.f32.mrf.mxu0
    %v858 = vadd.f32 0.0, %v857
    %859 = vmatmul.f32.gmra.mxu0 %v460
    %v860 = vpop.f32.mrf.mxu0
    %v861 = vadd.f32 0.0, %v860
    %862 = vmatmul.f32.gmra.mxu0 %v463
    %v863 = vpop.f32.mrf.mxu0
    %v864 = vadd.f32 0.0, %v863
    %865 = vmatmul.f32.gmra.mxu0 %v466
    %v866 = vpop.f32.mrf.mxu0
    %v867 = vadd.f32 0.0, %v866
    %868 = vmatmul.f32.gmra.mxu0 %v469
    %v869 = vpop.f32.mrf.mxu0
    %v870 = vadd.f32 0.0, %v869
    %871 = vmatmul.f32.gmra.mxu0 %v472
    %v872 = vpop.f32.mrf.mxu0
    %v873 = vadd.f32 0.0, %v872
    %874 = vmatmul.f32.gmra.mxu0 %v475
    %v875 = vpop.f32.mrf.mxu0
    %v876 = vadd.f32 0.0, %v875
    %877 = vmatmul.f32.gmra.mxu0 %v478
    %v878 = vpop.f32.mrf.mxu0
    %v879 = vadd.f32 0.0, %v878
    %880 = vmatmul.f32.gmra.mxu0 %v481
    %v881 = vpop.f32.mrf.mxu0
    %v882 = vadd.f32 0.0, %v881
    %883 = vmatmul.f32.gmra.mxu0 %v484
    %v884 = vpop.f32.mrf.mxu0
    %v885 = vadd.f32 0.0, %v884
    %886 = vmatmul.f32.gmra.mxu0 %v487
    %v887 = vpop.f32.mrf.mxu0
    %v888 = vadd.f32 0.0, %v887
    %889 = vmatmul.f32.gmra.mxu0 %v490
    %v890 = vpop.f32.mrf.mxu0
    %v891 = vadd.f32 0.0, %v890
    %892 = vmatmul.f32.gmra.mxu0 %v493
    %v893 = vpop.f32.mrf.mxu0
    %v894 = vadd.f32 0.0, %v893
    %895 = vmatmul.f32.gmra.mxu0 %v496
    %v896 = vpop.f32.mrf.mxu0
    %v897 = vadd.f32 0.0, %v896
    %898 = vmatmul.f32.gmra.mxu0 %v499
    %v899 = vpop.f32.mrf.mxu0
    %v900 = vadd.f32 0.0, %v899
    %901 = vmatmul.f32.gmra.mxu0 %v502
    %v902 = vpop.f32.mrf.mxu0
    %v903 = vadd.f32 0.0, %v902
    %904 = vmatmul.f32.gmra.mxu0 %v505
    %v905 = vpop.f32.mrf.mxu0
    %v906 = vadd.f32 0.0, %v905
    %907 = vmatmul.f32.gmra.mxu0 %v508
    %v908 = vpop.f32.mrf.mxu0
    %v909 = vadd.f32 0.0, %v908
    %910 = vmatmul.f32.gmra.mxu0 %v511
    %v911 = vpop.f32.mrf.mxu0
    %v912 = vadd.f32 0.0, %v911
    %913 = vmatmul.f32.gmra.mxu0 %v514
    %v914 = vpop.f32.mrf.mxu0
    %v915 = vadd.f32 0.0, %v914
    %916 = vmatmul.f32.gmra.mxu0 %v517
    %v917 = vpop.f32.mrf.mxu0
    %v918 = vadd.f32 0.0, %v917
    %919 = vmatmul.f32.gmra.mxu0 %v520
    %v920 = vpop.f32.mrf.mxu0
    %v921 = vadd.f32 0.0, %v920
    %922 = vmatmul.f32.gmra.mxu0 %v523
    %v923 = vpop.f32.mrf.mxu0
    %v924 = vadd.f32 0.0, %v923
    %925 = vmatmul.f32.gmra.mxu0 %v526
    %v926 = vpop.f32.mrf.mxu0
    %v927 = vadd.f32 0.0, %v926
    %928 = vmatmul.f32.gmra.mxu0 %v529
    %v929 = vpop.f32.mrf.mxu0
    %v930 = vadd.f32 0.0, %v929
    %931 = vmatmul.f32.gmra.mxu0 %v532
    %v932 = vpop.f32.mrf.mxu0
    %v933 = vadd.f32 0.0, %v932
    %934 = vmatmul.f32.gmra.mxu0 %v535
    %v935 = vpop.f32.mrf.mxu0
    %v936 = vadd.f32 0.0, %v935
    %937 = vmatmul.f32.gmra.mxu0 %v538
    %v938 = vpop.f32.mrf.mxu0
    %v939 = vadd.f32 0.0, %v938
    %940 = vmatmul.f32.gmra.mxu0 %v541
    %v941 = vpop.f32.mrf.mxu0
    %v942 = vadd.f32 0.0, %v941
    %943 = vmatmul.f32.gmra.mxu0 %v544
    %v944 = vpop.f32.mrf.mxu0
    %v945 = vadd.f32 0.0, %v944
    %946 = vmatmul.f32.gmra.mxu0 %v547
    %v947 = vpop.f32.mrf.mxu0
    %v948 = vadd.f32 0.0, %v947
    %949 = vmatmul.f32.gmra.mxu0 %v550
    %v950 = vpop.f32.mrf.mxu0
    %v951 = vadd.f32 0.0, %v950
    %952 = vmatmul.f32.gmra.mxu0 %v553
    %v953 = vpop.f32.mrf.mxu0
    %v954 = vadd.f32 0.0, %v953
    %955 = vmatmul.f32.gmra.mxu0 %v556
    %v956 = vpop.f32.mrf.mxu0
    %v957 = vadd.f32 0.0, %v956
    %958 = vmatmul.f32.gmra.mxu0 %v559
    %v959 = vpop.f32.mrf.mxu0
    %v960 = vadd.f32 0.0, %v959
    %961 = vmatmul.f32.gmra.mxu0 %v562
    %v962 = vpop.f32.mrf.mxu0
    %v963 = vadd.f32 0.0, %v962
    %964 = vmatmul.f32.gmra.mxu0 %v565
    %v965 = vpop.f32.mrf.mxu0
    %v966 = vadd.f32 0.0, %v965
    %967 = vmatmul.f32.gmra.mxu0 %v568
    %v968 = vpop.f32.mrf.mxu0
    %v969 = vadd.f32 0.0, %v968
    %970 = vmatmul.f32.gmra.mxu0 %v571
    %v971 = vpop.f32.mrf.mxu0
    %v972 = vadd.f32 0.0, %v971
    %973 = vmatmul.f32.gmra.mxu0 %v574
    %v974 = vpop.f32.mrf.mxu0
    %v975 = vadd.f32 0.0, %v974
    %976 = vmatmul.f32.gmra.mxu0 %v577
    %v977 = vpop.f32.mrf.mxu0
    %v978 = vadd.f32 0.0, %v977
    %979 = vmatmul.f32.gmra.mxu0 %v580
    %v980 = vpop.f32.mrf.mxu0
    %v981 = vadd.f32 0.0, %v980
    %982 = vdwg.mxu0
    %v983 = vld [vmem:[#allocation2] sm:$0xff]
    %v984 = vadd.f32 %v600, %v983
    %v985 = vadd.f32 %v603, %v983
    %v986 = vadd.f32 %v606, %v983
    %v987 = vadd.f32 %v609, %v983
    %v988 = vadd.f32 %v612, %v983
    %v989 = vadd.f32 %v615, %v983
    %v990 = vadd.f32 %v618, %v983
    %v991 = vadd.f32 %v621, %v983
    %v992 = vadd.f32 %v624, %v983
    %v993 = vadd.f32 %v627, %v983
    %v994 = vadd.f32 %v630, %v983
    %v995 = vadd.f32 %v633, %v983
    %v996 = vadd.f32 %v636, %v983
    %v997 = vadd.f32 %v639, %v983
    %v998 = vadd.f32 %v642, %v983
    %v999 = vadd.f32 %v645, %v983
    %v1000 = vadd.f32 %v648, %v983
    %v1001 = vadd.f32 %v651, %v983
    %v1002 = vadd.f32 %v654, %v983
    %v1003 = vadd.f32 %v657, %v983
    %v1004 = vadd.f32 %v660, %v983
    %v1005 = vadd.f32 %v663, %v983
    %v1006 = vadd.f32 %v666, %v983
    %v1007 = vadd.f32 %v669, %v983
    %v1008 = vadd.f32 %v672, %v983
    %v1009 = vadd.f32 %v675, %v983
    %v1010 = vadd.f32 %v678, %v983
    %v1011 = vadd.f32 %v681, %v983
    %v1012 = vadd.f32 %v684, %v983
    %v1013 = vadd.f32 %v687, %v983
    %v1014 = vadd.f32 %v690, %v983
    %v1015 = vadd.f32 %v693, %v983
    %v1016 = vadd.f32 %v696, %v983
    %v1017 = vadd.f32 %v699, %v983
    %v1018 = vadd.f32 %v702, %v983
    %v1019 = vadd.f32 %v705, %v983
    %v1020 = vadd.f32 %v708, %v983
    %v1021 = vadd.f32 %v711, %v983
    %v1022 = vadd.f32 %v714, %v983
    %v1023 = vadd.f32 %v717, %v983
    %v1024 = vadd.f32 %v720, %v983
    %v1025 = vadd.f32 %v723, %v983
    %v1026 = vadd.f32 %v726, %v983
    %v1027 = vadd.f32 %v729, %v983
    %v1028 = vadd.f32 %v732, %v983
    %v1029 = vadd.f32 %v735, %v983
    %v1030 = vadd.f32 %v738, %v983
    %v1031 = vadd.f32 %v741, %v983
    %v1032 = vadd.f32 %v744, %v983
    %v1033 = vadd.f32 %v747, %v983
    %v1034 = vadd.f32 %v750, %v983
    %v1035 = vadd.f32 %v753, %v983
    %v1036 = vadd.f32 %v756, %v983
    %v1037 = vadd.f32 %v759, %v983
    %v1038 = vadd.f32 %v762, %v983
    %v1039 = vadd.f32 %v765, %v983
    %v1040 = vadd.f32 %v768, %v983
    %v1041 = vadd.f32 %v771, %v983
    %v1042 = vadd.f32 %v774, %v983
    %v1043 = vadd.f32 %v777, %v983
    %v1044 = vadd.f32 %v780, %v983
    %v1045 = vadd.f32 %v783, %v983
    %v1046 = vadd.f32 %v786, %v983
    %v1047 = vadd.f32 %v789, %v983
    %v1048 = vadd.f32 %v792, %v983
    %v1049 = vadd.f32 %v795, %v983
    %v1050 = vadd.f32 %v798, %v983
    %v1051 = vadd.f32 %v801, %v983
    %v1052 = vadd.f32 %v804, %v983
    %v1053 = vadd.f32 %v807, %v983
    %v1054 = vadd.f32 %v810, %v983
    %v1055 = vadd.f32 %v813, %v983
    %v1056 = vadd.f32 %v816, %v983
    %v1057 = vadd.f32 %v819, %v983
    %v1058 = vadd.f32 %v822, %v983
    %v1059 = vadd.f32 %v825, %v983
    %v1060 = vadd.f32 %v828, %v983
    %v1061 = vadd.f32 %v831, %v983
    %v1062 = vadd.f32 %v834, %v983
    %v1063 = vadd.f32 %v837, %v983
    %v1064 = vadd.f32 %v840, %v983
    %v1065 = vadd.f32 %v843, %v983
    %v1066 = vadd.f32 %v846, %v983
    %v1067 = vadd.f32 %v849, %v983
    %v1068 = vadd.f32 %v852, %v983
    %v1069 = vadd.f32 %v855, %v983
    %v1070 = vadd.f32 %v858, %v983
    %v1071 = vadd.f32 %v861, %v983
    %v1072 = vadd.f32 %v864, %v983
    %v1073 = vadd.f32 %v867, %v983
    %v1074 = vadd.f32 %v870, %v983
    %v1075 = vadd.f32 %v873, %v983
    %v1076 = vadd.f32 %v876, %v983
    %v1077 = vadd.f32 %v879, %v983
    %v1078 = vadd.f32 %v882, %v983
    %v1079 = vadd.f32 %v885, %v983
    %v1080 = vadd.f32 %v888, %v983
    %v1081 = vadd.f32 %v891, %v983
    %v1082 = vadd.f32 %v894, %v983
    %v1083 = vadd.f32 %v897, %v983
    %v1084 = vadd.f32 %v900, %v983
    %v1085 = vadd.f32 %v903, %v983
    %v1086 = vadd.f32 %v906, %v983
    %v1087 = vadd.f32 %v909, %v983
    %v1088 = vadd.f32 %v912, %v983
    %v1089 = vadd.f32 %v915, %v983
    %v1090 = vadd.f32 %v918, %v983
    %v1091 = vadd.f32 %v921, %v983
    %v1092 = vadd.f32 %v924, %v983
    %v1093 = vadd.f32 %v927, %v983
    %v1094 = vadd.f32 %v930, %v983
    %v1095 = vadd.f32 %v933, %v983
    %v1096 = vadd.f32 %v936, %v983
    %v1097 = vadd.f32 %v939, %v983
    %v1098 = vadd.f32 %v942, %v983
    %v1099 = vadd.f32 %v945, %v983
    %v1100 = vadd.f32 %v948, %v983
    %v1101 = vadd.f32 %v951, %v983
    %v1102 = vadd.f32 %v954, %v983
    %v1103 = vadd.f32 %v957, %v983
    %v1104 = vadd.f32 %v960, %v983
    %v1105 = vadd.f32 %v963, %v983
    %v1106 = vadd.f32 %v966, %v983
    %v1107 = vadd.f32 %v969, %v983
    %v1108 = vadd.f32 %v972, %v983
    %v1109 = vadd.f32 %v975, %v983
    %v1110 = vadd.f32 %v978, %v983
    %v1111 = vadd.f32 %v981, %v983
    %v1112 = vtanh.pop %v984
    %v1113 = vtanh.pop %v985
    %v1114 = vtanh.pop %v986
    %v1115 = vtanh.pop %v987
    %v1116 = vtanh.pop %v988
    %v1117 = vtanh.pop %v989
    %v1118 = vtanh.pop %v990
    %v1119 = vtanh.pop %v991
    %v1120 = vtanh.pop %v992
    %v1121 = vtanh.pop %v993
    %v1122 = vtanh.pop %v994
    %v1123 = vtanh.pop %v995
    %v1124 = vtanh.pop %v996
    %v1125 = vtanh.pop %v997
    %v1126 = vtanh.pop %v998
    %v1127 = vtanh.pop %v999
    %v1128 = vtanh.pop %v1000
    %v1129 = vtanh.pop %v1001
    %v1130 = vtanh.pop %v1002
    %v1131 = vtanh.pop %v1003
    %v1132 = vtanh.pop %v1004
    %v1133 = vtanh.pop %v1005
    %v1134 = vtanh.pop %v1006
    %v1135 = vtanh.pop %v1007
    %v1136 = vtanh.pop %v1008
    %v1137 = vtanh.pop %v1009
    %v1138 = vtanh.pop %v1010
    %v1139 = vtanh.pop %v1011
    %v1140 = vtanh.pop %v1012
    %v1141 = vtanh.pop %v1013
    %v1142 = vtanh.pop %v1014
    %v1143 = vtanh.pop %v1015
    %v1144 = vtanh.pop %v1016
    %v1145 = vtanh.pop %v1017
    %v1146 = vtanh.pop %v1018
    %v1147 = vtanh.pop %v1019
    %v1148 = vtanh.pop %v1020
    %v1149 = vtanh.pop %v1021
    %v1150 = vtanh.pop %v1022
    %v1151 = vtanh.pop %v1023
    %v1152 = vtanh.pop %v1024
    %v1153 = vtanh.pop %v1025
    %v1154 = vtanh.pop %v1026
    %v1155 = vtanh.pop %v1027
    %v1156 = vtanh.pop %v1028
    %v1157 = vtanh.pop %v1029
    %v1158 = vtanh.pop %v1030
    %v1159 = vtanh.pop %v1031
    %v1160 = vtanh.pop %v1032
    %v1161 = vtanh.pop %v1033
    %v1162 = vtanh.pop %v1034
    %v1163 = vtanh.pop %v1035
    %v1164 = vtanh.pop %v1036
    %v1165 = vtanh.pop %v1037
    %v1166 = vtanh.pop %v1038
    %v1167 = vtanh.pop %v1039
    %v1168 = vtanh.pop %v1040
    %v1169 = vtanh.pop %v1041
    %v1170 = vtanh.pop %v1042
    %v1171 = vtanh.pop %v1043
    %v1172 = vtanh.pop %v1044
    %v1173 = vtanh.pop %v1045
    %v1174 = vtanh.pop %v1046
    %v1175 = vtanh.pop %v1047
    %v1176 = vtanh.pop %v1048
    %v1177 = vtanh.pop %v1049
    %v1178 = vtanh.pop %v1050
    %v1179 = vtanh.pop %v1051
    %v1180 = vtanh.pop %v1052
    %v1181 = vtanh.pop %v1053
    %v1182 = vtanh.pop %v1054
    %v1183 = vtanh.pop %v1055
    %v1184 = vtanh.pop %v1056
    %v1185 = vtanh.pop %v1057
    %v1186 = vtanh.pop %v1058
    %v1187 = vtanh.pop %v1059
    %v1188 = vtanh.pop %v1060
    %v1189 = vtanh.pop %v1061
    %v1190 = vtanh.pop %v1062
    %v1191 = vtanh.pop %v1063
    %v1192 = vtanh.pop %v1064
    %v1193 = vtanh.pop %v1065
    %v1194 = vtanh.pop %v1066
    %v1195 = vtanh.pop %v1067
    %v1196 = vtanh.pop %v1068
    %v1197 = vtanh.pop %v1069
    %v1198 = vtanh.pop %v1070
    %v1199 = vtanh.pop %v1071
    %v1200 = vtanh.pop %v1072
    %v1201 = vtanh.pop %v1073
    %v1202 = vtanh.pop %v1074
    %v1203 = vtanh.pop %v1075
    %v1204 = vtanh.pop %v1076
    %v1205 = vtanh.pop %v1077
    %v1206 = vtanh.pop %v1078
    %v1207 = vtanh.pop %v1079
    %v1208 = vtanh.pop %v1080
    %v1209 = vtanh.pop %v1081
    %v1210 = vtanh.pop %v1082
    %v1211 = vtanh.pop %v1083
    %v1212 = vtanh.pop %v1084
    %v1213 = vtanh.pop %v1085
    %v1214 = vtanh.pop %v1086
    %v1215 = vtanh.pop %v1087
    %v1216 = vtanh.pop %v1088
    %v1217 = vtanh.pop %v1089
    %v1218 = vtanh.pop %v1090
    %v1219 = vtanh.pop %v1091
    %v1220 = vtanh.pop %v1092
    %v1221 = vtanh.pop %v1093
    %v1222 = vtanh.pop %v1094
    %v1223 = vtanh.pop %v1095
    %v1224 = vtanh.pop %v1096
    %v1225 = vtanh.pop %v1097
    %v1226 = vtanh.pop %v1098
    %v1227 = vtanh.pop %v1099
    %v1228 = vtanh.pop %v1100
    %v1229 = vtanh.pop %v1101
    %v1230 = vtanh.pop %v1102
    %v1231 = vtanh.pop %v1103
    %v1232 = vtanh.pop %v1104
    %v1233 = vtanh.pop %v1105
    %v1234 = vtanh.pop %v1106
    %v1235 = vtanh.pop %v1107
    %v1236 = vtanh.pop %v1108
    %v1237 = vtanh.pop %v1109
    %v1238 = vtanh.pop %v1110
    %v1239 = vtanh.pop %v1111
    %v1240 = vld [vmem:[%s6] sm:$0x1]
    %v1242 = vperm.slane %v1240, 0
    %v1244 = vmul.f32 %v1112, %v1242
    %v1245 = vmul.f32 %v1113, %v1242
    %v1246 = vmul.f32 %v1114, %v1242
    %v1247 = vmul.f32 %v1115, %v1242
    %v1248 = vmul.f32 %v1116, %v1242
    %v1249 = vmul.f32 %v1117, %v1242
    %v1250 = vmul.f32 %v1118, %v1242
    %v1251 = vmul.f32 %v1119, %v1242
    %v1252 = vmul.f32 %v1120, %v1242
    %v1253 = vmul.f32 %v1121, %v1242
    %v1254 = vmul.f32 %v1122, %v1242
    %v1255 = vmul.f32 %v1123, %v1242
    %v1256 = vmul.f32 %v1124, %v1242
    %v1257 = vmul.f32 %v1125, %v1242
    %v1258 = vmul.f32 %v1126, %v1242
    %v1259 = vmul.f32 %v1127, %v1242
    %v1260 = vmul.f32 %v1128, %v1242
    %v1261 = vmul.f32 %v1129, %v1242
    %v1262 = vmul.f32 %v1130, %v1242
    %v1263 = vmul.f32 %v1131, %v1242
    %v1264 = vmul.f32 %v1132, %v1242
    %v1265 = vmul.f32 %v1133, %v1242
    %v1266 = vmul.f32 %v1134, %v1242
    %v1267 = vmul.f32 %v1135, %v1242
    %v1268 = vmul.f32 %v1136, %v1242
    %v1269 = vmul.f32 %v1137, %v1242
    %v1270 = vmul.f32 %v1138, %v1242
    %v1271 = vmul.f32 %v1139, %v1242
    %v1272 = vmul.f32 %v1140, %v1242
    %v1273 = vmul.f32 %v1141, %v1242
    %v1274 = vmul.f32 %v1142, %v1242
    %v1275 = vmul.f32 %v1143, %v1242
    %v1276 = vmul.f32 %v1144, %v1242
    %v1277 = vmul.f32 %v1145, %v1242
    %v1278 = vmul.f32 %v1146, %v1242
    %v1279 = vmul.f32 %v1147, %v1242
    %v1280 = vmul.f32 %v1148, %v1242
    %v1281 = vmul.f32 %v1149, %v1242
    %v1282 = vmul.f32 %v1150, %v1242
    %v1283 = vmul.f32 %v1151, %v1242
    %v1284 = vmul.f32 %v1152, %v1242
    %v1285 = vmul.f32 %v1153, %v1242
    %v1286 = vmul.f32 %v1154, %v1242
    %v1287 = vmul.f32 %v1155, %v1242
    %v1288 = vmul.f32 %v1156, %v1242
    %v1289 = vmul.f32 %v1157, %v1242
    %v1290 = vmul.f32 %v1158, %v1242
    %v1291 = vmul.f32 %v1159, %v1242
    %v1292 = vmul.f32 %v1160, %v1242
    %v1293 = vmul.f32 %v1161, %v1242
    %v1294 = vmul.f32 %v1162, %v1242
    %v1295 = vmul.f32 %v1163, %v1242
    %v1296 = vmul.f32 %v1164, %v1242
    %v1297 = vmul.f32 %v1165, %v1242
    %v1298 = vmul.f32 %v1166, %v1242
    %v1299 = vmul.f32 %v1167, %v1242
    %v1300 = vmul.f32 %v1168, %v1242
    %v1301 = vmul.f32 %v1169, %v1242
    %v1302 = vmul.f32 %v1170, %v1242
    %v1303 = vmul.f32 %v1171, %v1242
    %v1304 = vmul.f32 %v1172, %v1242
    %v1305 = vmul.f32 %v1173, %v1242
    %v1306 = vmul.f32 %v1174, %v1242
    %v1307 = vmul.f32 %v1175, %v1242
    %v1308 = vmul.f32 %v1176, %v1242
    %v1309 = vmul.f32 %v1177, %v1242
    %v1310 = vmul.f32 %v1178, %v1242
    %v1311 = vmul.f32 %v1179, %v1242
    %v1312 = vmul.f32 %v1180, %v1242
    %v1313 = vmul.f32 %v1181, %v1242
    %v1314 = vmul.f32 %v1182, %v1242
    %v1315 = vmul.f32 %v1183, %v1242
    %v1316 = vmul.f32 %v1184, %v1242
    %v1317 = vmul.f32 %v1185, %v1242
    %v1318 = vmul.f32 %v1186, %v1242
    %v1319 = vmul.f32 %v1187, %v1242
    %v1320 = vmul.f32 %v1188, %v1242
    %v1321 = vmul.f32 %v1189, %v1242
    %v1322 = vmul.f32 %v1190, %v1242
    %v1323 = vmul.f32 %v1191, %v1242
    %v1324 = vmul.f32 %v1192, %v1242
    %v1325 = vmul.f32 %v1193, %v1242
    %v1326 = vmul.f32 %v1194, %v1242
    %v1327 = vmul.f32 %v1195, %v1242
    %v1328 = vmul.f32 %v1196, %v1242
    %v1329 = vmul.f32 %v1197, %v1242
    %v1330 = vmul.f32 %v1198, %v1242
    %v1331 = vmul.f32 %v1199, %v1242
    %v1332 = vmul.f32 %v1200, %v1242
    %v1333 = vmul.f32 %v1201, %v1242
    %v1334 = vmul.f32 %v1202, %v1242
    %v1335 = vmul.f32 %v1203, %v1242
    %v1336 = vmul.f32 %v1204, %v1242
    %v1337 = vmul.f32 %v1205, %v1242
    %v1338 = vmul.f32 %v1206, %v1242
    %v1339 = vmul.f32 %v1207, %v1242
    %v1340 = vmul.f32 %v1208, %v1242
    %v1341 = vmul.f32 %v1209, %v1242
    %v1342 = vmul.f32 %v1210, %v1242
    %v1343 = vmul.f32 %v1211, %v1242
    %v1344 = vmul.f32 %v1212, %v1242
    %v1345 = vmul.f32 %v1213, %v1242
    %v1346 = vmul.f32 %v1214, %v1242
    %v1347 = vmul.f32 %v1215, %v1242
    %v1348 = vmul.f32 %v1216, %v1242
    %v1349 = vmul.f32 %v1217, %v1242
    %v1350 = vmul.f32 %v1218, %v1242
    %v1351 = vmul.f32 %v1219, %v1242
    %v1352 = vmul.f32 %v1220, %v1242
    %v1353 = vmul.f32 %v1221, %v1242
    %v1354 = vmul.f32 %v1222, %v1242
    %v1355 = vmul.f32 %v1223, %v1242
    %v1356 = vmul.f32 %v1224, %v1242
    %v1357 = vmul.f32 %v1225, %v1242
    %v1358 = vmul.f32 %v1226, %v1242
    %v1359 = vmul.f32 %v1227, %v1242
    %v1360 = vmul.f32 %v1228, %v1242
    %v1361 = vmul.f32 %v1229, %v1242
    %v1362 = vmul.f32 %v1230, %v1242
    %v1363 = vmul.f32 %v1231, %v1242
    %v1364 = vmul.f32 %v1232, %v1242
    %v1365 = vmul.f32 %v1233, %v1242
    %v1366 = vmul.f32 %v1234, %v1242
    %v1367 = vmul.f32 %v1235, %v1242
    %v1368 = vmul.f32 %v1236, %v1242
    %v1369 = vmul.f32 %v1237, %v1242
    %v1370 = vmul.f32 %v1238, %v1242
    %v1371 = vmul.f32 %v1239, %v1242
    %v1372 = vsel %vm197, %v1244, 0.0
    %1373 = vadd.xlane.f32.xlu0 %v1372
    %v1374 = vpop.xlane.xlu0 %1373
    %v1375 = vsel %vm197, %v1245, 0.0
    %1376 = vadd.xlane.f32.xlu0 %v1375
    %v1377 = vpop.xlane.xlu0 %1376
    %v1378 = vsel %vm197, %v1246, 0.0
    %1379 = vadd.xlane.f32.xlu0 %v1378
    %v1380 = vpop.xlane.xlu0 %1379
    %v1381 = vsel %vm197, %v1247, 0.0
    %1382 = vadd.xlane.f32.xlu0 %v1381
    %v1383 = vpop.xlane.xlu0 %1382
    %v1384 = vsel %vm197, %v1248, 0.0
    %1385 = vadd.xlane.f32.xlu0 %v1384
    %v1386 = vpop.xlane.xlu0 %1385
    %v1387 = vsel %vm197, %v1249, 0.0
    %1388 = vadd.xlane.f32.xlu0 %v1387
    %v1389 = vpop.xlane.xlu0 %1388
    %v1390 = vsel %vm197, %v1250, 0.0
    %1391 = vadd.xlane.f32.xlu0 %v1390
    %v1392 = vpop.xlane.xlu0 %1391
    %v1393 = vsel %vm197, %v1251, 0.0
    %1394 = vadd.xlane.f32.xlu0 %v1393
    %v1395 = vpop.xlane.xlu0 %1394
    %v1396 = vsel %vm197, %v1252, 0.0
    %1397 = vadd.xlane.f32.xlu0 %v1396
    %v1398 = vpop.xlane.xlu0 %1397
    %v1399 = vsel %vm197, %v1253, 0.0
    %1400 = vadd.xlane.f32.xlu0 %v1399
    %v1401 = vpop.xlane.xlu0 %1400
    %v1402 = vsel %vm197, %v1254, 0.0
    %1403 = vadd.xlane.f32.xlu0 %v1402
    %v1404 = vpop.xlane.xlu0 %1403
    %v1405 = vsel %vm197, %v1255, 0.0
    %1406 = vadd.xlane.f32.xlu0 %v1405
    %v1407 = vpop.xlane.xlu0 %1406
    %v1408 = vsel %vm197, %v1256, 0.0
    %1409 = vadd.xlane.f32.xlu0 %v1408
    %v1410 = vpop.xlane.xlu0 %1409
    %v1411 = vsel %vm197, %v1257, 0.0
    %1412 = vadd.xlane.f32.xlu0 %v1411
    %v1413 = vpop.xlane.xlu0 %1412
    %v1414 = vsel %vm197, %v1258, 0.0
    %1415 = vadd.xlane.f32.xlu0 %v1414
    %v1416 = vpop.xlane.xlu0 %1415
    %v1417 = vsel %vm197, %v1259, 0.0
    %1418 = vadd.xlane.f32.xlu0 %v1417
    %v1419 = vpop.xlane.xlu0 %1418
    %v1420 = vsel %vm197, %v1260, 0.0
    %1421 = vadd.xlane.f32.xlu0 %v1420
    %v1422 = vpop.xlane.xlu0 %1421
    %v1423 = vsel %vm197, %v1261, 0.0
    %1424 = vadd.xlane.f32.xlu0 %v1423
    %v1425 = vpop.xlane.xlu0 %1424
    %v1426 = vsel %vm197, %v1262, 0.0
    %1427 = vadd.xlane.f32.xlu0 %v1426
    %v1428 = vpop.xlane.xlu0 %1427
    %v1429 = vsel %vm197, %v1263, 0.0
    %1430 = vadd.xlane.f32.xlu0 %v1429
    %v1431 = vpop.xlane.xlu0 %1430
    %v1432 = vsel %vm197, %v1264, 0.0
    %1433 = vadd.xlane.f32.xlu0 %v1432
    %v1434 = vpop.xlane.xlu0 %1433
    %v1435 = vsel %vm197, %v1265, 0.0
    %1436 = vadd.xlane.f32.xlu0 %v1435
    %v1437 = vpop.xlane.xlu0 %1436
    %v1438 = vsel %vm197, %v1266, 0.0
    %1439 = vadd.xlane.f32.xlu0 %v1438
    %v1440 = vpop.xlane.xlu0 %1439
    %v1441 = vsel %vm197, %v1267, 0.0
    %1442 = vadd.xlane.f32.xlu0 %v1441
    %v1443 = vpop.xlane.xlu0 %1442
    %v1444 = vsel %vm197, %v1268, 0.0
    %1445 = vadd.xlane.f32.xlu0 %v1444
    %v1446 = vpop.xlane.xlu0 %1445
    %v1447 = vsel %vm197, %v1269, 0.0
    %1448 = vadd.xlane.f32.xlu0 %v1447
    %v1449 = vpop.xlane.xlu0 %1448
    %v1450 = vsel %vm197, %v1270, 0.0
    %1451 = vadd.xlane.f32.xlu0 %v1450
    %v1452 = vpop.xlane.xlu0 %1451
    %v1453 = vsel %vm197, %v1271, 0.0
    %1454 = vadd.xlane.f32.xlu0 %v1453
    %v1455 = vpop.xlane.xlu0 %1454
    %v1456 = vsel %vm197, %v1272, 0.0
    %1457 = vadd.xlane.f32.xlu0 %v1456
    %v1458 = vpop.xlane.xlu0 %1457
    %v1459 = vsel %vm197, %v1273, 0.0
    %1460 = vadd.xlane.f32.xlu0 %v1459
    %v1461 = vpop.xlane.xlu0 %1460
    %v1462 = vsel %vm197, %v1274, 0.0
    %1463 = vadd.xlane.f32.xlu0 %v1462
    %v1464 = vpop.xlane.xlu0 %1463
    %v1465 = vsel %vm197, %v1275, 0.0
    %1466 = vadd.xlane.f32.xlu0 %v1465
    %v1467 = vpop.xlane.xlu0 %1466
    %v1468 = vsel %vm197, %v1276, 0.0
    %1469 = vadd.xlane.f32.xlu0 %v1468
    %v1470 = vpop.xlane.xlu0 %1469
    %v1471 = vsel %vm197, %v1277, 0.0
    %1472 = vadd.xlane.f32.xlu0 %v1471
    %v1473 = vpop.xlane.xlu0 %1472
    %v1474 = vsel %vm197, %v1278, 0.0
    %1475 = vadd.xlane.f32.xlu0 %v1474
    %v1476 = vpop.xlane.xlu0 %1475
    %v1477 = vsel %vm197, %v1279, 0.0
    %1478 = vadd.xlane.f32.xlu0 %v1477
    %v1479 = vpop.xlane.xlu0 %1478
    %v1480 = vsel %vm197, %v1280, 0.0
    %1481 = vadd.xlane.f32.xlu0 %v1480
    %v1482 = vpop.xlane.xlu0 %1481
    %v1483 = vsel %vm197, %v1281, 0.0
    %1484 = vadd.xlane.f32.xlu0 %v1483
    %v1485 = vpop.xlane.xlu0 %1484
    %v1486 = vsel %vm197, %v1282, 0.0
    %1487 = vadd.xlane.f32.xlu0 %v1486
    %v1488 = vpop.xlane.xlu0 %1487
    %v1489 = vsel %vm197, %v1283, 0.0
    %1490 = vadd.xlane.f32.xlu0 %v1489
    %v1491 = vpop.xlane.xlu0 %1490
    %v1492 = vsel %vm197, %v1284, 0.0
    %1493 = vadd.xlane.f32.xlu0 %v1492
    %v1494 = vpop.xlane.xlu0 %1493
    %v1495 = vsel %vm197, %v1285, 0.0
    %1496 = vadd.xlane.f32.xlu0 %v1495
    %v1497 = vpop.xlane.xlu0 %1496
    %v1498 = vsel %vm197, %v1286, 0.0
    %1499 = vadd.xlane.f32.xlu0 %v1498
    %v1500 = vpop.xlane.xlu0 %1499
    %v1501 = vsel %vm197, %v1287, 0.0
    %1502 = vadd.xlane.f32.xlu0 %v1501
    %v1503 = vpop.xlane.xlu0 %1502
    %v1504 = vsel %vm197, %v1288, 0.0
    %1505 = vadd.xlane.f32.xlu0 %v1504
    %v1506 = vpop.xlane.xlu0 %1505
    %v1507 = vsel %vm197, %v1289, 0.0
    %1508 = vadd.xlane.f32.xlu0 %v1507
    %v1509 = vpop.xlane.xlu0 %1508
    %v1510 = vsel %vm197, %v1290, 0.0
    %1511 = vadd.xlane.f32.xlu0 %v1510
    %v1512 = vpop.xlane.xlu0 %1511
    %v1513 = vsel %vm197, %v1291, 0.0
    %1514 = vadd.xlane.f32.xlu0 %v1513
    %v1515 = vpop.xlane.xlu0 %1514
    %v1516 = vsel %vm197, %v1292, 0.0
    %1517 = vadd.xlane.f32.xlu0 %v1516
    %v1518 = vpop.xlane.xlu0 %1517
    %v1519 = vsel %vm197, %v1293, 0.0
    %1520 = vadd.xlane.f32.xlu0 %v1519
    %v1521 = vpop.xlane.xlu0 %1520
    %v1522 = vsel %vm197, %v1294, 0.0
    %1523 = vadd.xlane.f32.xlu0 %v1522
    %v1524 = vpop.xlane.xlu0 %1523
    %v1525 = vsel %vm197, %v1295, 0.0
    %1526 = vadd.xlane.f32.xlu0 %v1525
    %v1527 = vpop.xlane.xlu0 %1526
    %v1528 = vsel %vm197, %v1296, 0.0
    %1529 = vadd.xlane.f32.xlu0 %v1528
    %v1530 = vpop.xlane.xlu0 %1529
    %v1531 = vsel %vm197, %v1297, 0.0
    %1532 = vadd.xlane.f32.xlu0 %v1531
    %v1533 = vpop.xlane.xlu0 %1532
    %v1534 = vsel %vm197, %v1298, 0.0
    %1535 = vadd.xlane.f32.xlu0 %v1534
    %v1536 = vpop.xlane.xlu0 %1535
    %v1537 = vsel %vm197, %v1299, 0.0
    %1538 = vadd.xlane.f32.xlu0 %v1537
    %v1539 = vpop.xlane.xlu0 %1538
    %v1540 = vsel %vm197, %v1300, 0.0
    %1541 = vadd.xlane.f32.xlu0 %v1540
    %v1542 = vpop.xlane.xlu0 %1541
    %v1543 = vsel %vm197, %v1301, 0.0
    %1544 = vadd.xlane.f32.xlu0 %v1543
    %v1545 = vpop.xlane.xlu0 %1544
    %v1546 = vsel %vm197, %v1302, 0.0
    %1547 = vadd.xlane.f32.xlu0 %v1546
    %v1548 = vpop.xlane.xlu0 %1547
    %v1549 = vsel %vm197, %v1303, 0.0
    %1550 = vadd.xlane.f32.xlu0 %v1549
    %v1551 = vpop.xlane.xlu0 %1550
    %v1552 = vsel %vm197, %v1304, 0.0
    %1553 = vadd.xlane.f32.xlu0 %v1552
    %v1554 = vpop.xlane.xlu0 %1553
    %v1555 = vsel %vm197, %v1305, 0.0
    %1556 = vadd.xlane.f32.xlu0 %v1555
    %v1557 = vpop.xlane.xlu0 %1556
    %v1558 = vsel %vm197, %v1306, 0.0
    %1559 = vadd.xlane.f32.xlu0 %v1558
    %v1560 = vpop.xlane.xlu0 %1559
    %v1561 = vsel %vm197, %v1307, 0.0
    %1562 = vadd.xlane.f32.xlu0 %v1561
    %v1563 = vpop.xlane.xlu0 %1562
    %v1564 = vsel %vm197, %v1308, 0.0
    %1565 = vadd.xlane.f32.xlu0 %v1564
    %v1566 = vpop.xlane.xlu0 %1565
    %v1567 = vsel %vm197, %v1309, 0.0
    %1568 = vadd.xlane.f32.xlu0 %v1567
    %v1569 = vpop.xlane.xlu0 %1568
    %v1570 = vsel %vm197, %v1310, 0.0
    %1571 = vadd.xlane.f32.xlu0 %v1570
    %v1572 = vpop.xlane.xlu0 %1571
    %v1573 = vsel %vm197, %v1311, 0.0
    %1574 = vadd.xlane.f32.xlu0 %v1573
    %v1575 = vpop.xlane.xlu0 %1574
    %v1576 = vsel %vm197, %v1312, 0.0
    %1577 = vadd.xlane.f32.xlu0 %v1576
    %v1578 = vpop.xlane.xlu0 %1577
    %v1579 = vsel %vm197, %v1313, 0.0
    %1580 = vadd.xlane.f32.xlu0 %v1579
    %v1581 = vpop.xlane.xlu0 %1580
    %v1582 = vsel %vm197, %v1314, 0.0
    %1583 = vadd.xlane.f32.xlu0 %v1582
    %v1584 = vpop.xlane.xlu0 %1583
    %v1585 = vsel %vm197, %v1315, 0.0
    %1586 = vadd.xlane.f32.xlu0 %v1585
    %v1587 = vpop.xlane.xlu0 %1586
    %v1588 = vsel %vm197, %v1316, 0.0
    %1589 = vadd.xlane.f32.xlu0 %v1588
    %v1590 = vpop.xlane.xlu0 %1589
    %v1591 = vsel %vm197, %v1317, 0.0
    %1592 = vadd.xlane.f32.xlu0 %v1591
    %v1593 = vpop.xlane.xlu0 %1592
    %v1594 = vsel %vm197, %v1318, 0.0
    %1595 = vadd.xlane.f32.xlu0 %v1594
    %v1596 = vpop.xlane.xlu0 %1595
    %v1597 = vsel %vm197, %v1319, 0.0
    %1598 = vadd.xlane.f32.xlu0 %v1597
    %v1599 = vpop.xlane.xlu0 %1598
    %v1600 = vsel %vm197, %v1320, 0.0
    %1601 = vadd.xlane.f32.xlu0 %v1600
    %v1602 = vpop.xlane.xlu0 %1601
    %v1603 = vsel %vm197, %v1321, 0.0
    %1604 = vadd.xlane.f32.xlu0 %v1603
    %v1605 = vpop.xlane.xlu0 %1604
    %v1606 = vsel %vm197, %v1322, 0.0
    %1607 = vadd.xlane.f32.xlu0 %v1606
    %v1608 = vpop.xlane.xlu0 %1607
    %v1609 = vsel %vm197, %v1323, 0.0
    %1610 = vadd.xlane.f32.xlu0 %v1609
    %v1611 = vpop.xlane.xlu0 %1610
    %v1612 = vsel %vm197, %v1324, 0.0
    %1613 = vadd.xlane.f32.xlu0 %v1612
    %v1614 = vpop.xlane.xlu0 %1613
    %v1615 = vsel %vm197, %v1325, 0.0
    %1616 = vadd.xlane.f32.xlu0 %v1615
    %v1617 = vpop.xlane.xlu0 %1616
    %v1618 = vsel %vm197, %v1326, 0.0
    %1619 = vadd.xlane.f32.xlu0 %v1618
    %v1620 = vpop.xlane.xlu0 %1619
    %v1621 = vsel %vm197, %v1327, 0.0
    %1622 = vadd.xlane.f32.xlu0 %v1621
    %v1623 = vpop.xlane.xlu0 %1622
    %v1624 = vsel %vm197, %v1328, 0.0
    %1625 = vadd.xlane.f32.xlu0 %v1624
    %v1626 = vpop.xlane.xlu0 %1625
    %v1627 = vsel %vm197, %v1329, 0.0
    %1628 = vadd.xlane.f32.xlu0 %v1627
    %v1629 = vpop.xlane.xlu0 %1628
    %v1630 = vsel %vm197, %v1330, 0.0
    %1631 = vadd.xlane.f32.xlu0 %v1630
    %v1632 = vpop.xlane.xlu0 %1631
    %v1633 = vsel %vm197, %v1331, 0.0
    %1634 = vadd.xlane.f32.xlu0 %v1633
    %v1635 = vpop.xlane.xlu0 %1634
    %v1636 = vsel %vm197, %v1332, 0.0
    %1637 = vadd.xlane.f32.xlu0 %v1636
    %v1638 = vpop.xlane.xlu0 %1637
    %v1639 = vsel %vm197, %v1333, 0.0
    %1640 = vadd.xlane.f32.xlu0 %v1639
    %v1641 = vpop.xlane.xlu0 %1640
    %v1642 = vsel %vm197, %v1334, 0.0
    %1643 = vadd.xlane.f32.xlu0 %v1642
    %v1644 = vpop.xlane.xlu0 %1643
    %v1645 = vsel %vm197, %v1335, 0.0
    %1646 = vadd.xlane.f32.xlu0 %v1645
    %v1647 = vpop.xlane.xlu0 %1646
    %v1648 = vsel %vm197, %v1336, 0.0
    %1649 = vadd.xlane.f32.xlu0 %v1648
    %v1650 = vpop.xlane.xlu0 %1649
    %v1651 = vsel %vm197, %v1337, 0.0
    %1652 = vadd.xlane.f32.xlu0 %v1651
    %v1653 = vpop.xlane.xlu0 %1652
    %v1654 = vsel %vm197, %v1338, 0.0
    %1655 = vadd.xlane.f32.xlu0 %v1654
    %v1656 = vpop.xlane.xlu0 %1655
    %v1657 = vsel %vm197, %v1339, 0.0
    %1658 = vadd.xlane.f32.xlu0 %v1657
    %v1659 = vpop.xlane.xlu0 %1658
    %v1660 = vsel %vm197, %v1340, 0.0
    %1661 = vadd.xlane.f32.xlu0 %v1660
    %v1662 = vpop.xlane.xlu0 %1661
    %v1663 = vsel %vm197, %v1341, 0.0
    %1664 = vadd.xlane.f32.xlu0 %v1663
    %v1665 = vpop.xlane.xlu0 %1664
    %v1666 = vsel %vm197, %v1342, 0.0
    %1667 = vadd.xlane.f32.xlu0 %v1666
    %v1668 = vpop.xlane.xlu0 %1667
    %v1669 = vsel %vm197, %v1343, 0.0
    %1670 = vadd.xlane.f32.xlu0 %v1669
    %v1671 = vpop.xlane.xlu0 %1670
    %v1672 = vsel %vm197, %v1344, 0.0
    %1673 = vadd.xlane.f32.xlu0 %v1672
    %v1674 = vpop.xlane.xlu0 %1673
    %v1675 = vsel %vm197, %v1345, 0.0
    %1676 = vadd.xlane.f32.xlu0 %v1675
    %v1677 = vpop.xlane.xlu0 %1676
    %v1678 = vsel %vm197, %v1346, 0.0
    %1679 = vadd.xlane.f32.xlu0 %v1678
    %v1680 = vpop.xlane.xlu0 %1679
    %v1681 = vsel %vm197, %v1347, 0.0
    %1682 = vadd.xlane.f32.xlu0 %v1681
    %v1683 = vpop.xlane.xlu0 %1682
    %v1684 = vsel %vm197, %v1348, 0.0
    %1685 = vadd.xlane.f32.xlu0 %v1684
    %v1686 = vpop.xlane.xlu0 %1685
    %v1687 = vsel %vm197, %v1349, 0.0
    %1688 = vadd.xlane.f32.xlu0 %v1687
    %v1689 = vpop.xlane.xlu0 %1688
    %v1690 = vsel %vm197, %v1350, 0.0
    %1691 = vadd.xlane.f32.xlu0 %v1690
    %v1692 = vpop.xlane.xlu0 %1691
    %v1693 = vsel %vm197, %v1351, 0.0
    %1694 = vadd.xlane.f32.xlu0 %v1693
    %v1695 = vpop.xlane.xlu0 %1694
    %v1696 = vsel %vm197, %v1352, 0.0
    %1697 = vadd.xlane.f32.xlu0 %v1696
    %v1698 = vpop.xlane.xlu0 %1697
    %v1699 = vsel %vm197, %v1353, 0.0
    %1700 = vadd.xlane.f32.xlu0 %v1699
    %v1701 = vpop.xlane.xlu0 %1700
    %v1702 = vsel %vm197, %v1354, 0.0
    %1703 = vadd.xlane.f32.xlu0 %v1702
    %v1704 = vpop.xlane.xlu0 %1703
    %v1705 = vsel %vm197, %v1355, 0.0
    %1706 = vadd.xlane.f32.xlu0 %v1705
    %v1707 = vpop.xlane.xlu0 %1706
    %v1708 = vsel %vm197, %v1356, 0.0
    %1709 = vadd.xlane.f32.xlu0 %v1708
    %v1710 = vpop.xlane.xlu0 %1709
    %v1711 = vsel %vm197, %v1357, 0.0
    %1712 = vadd.xlane.f32.xlu0 %v1711
    %v1713 = vpop.xlane.xlu0 %1712
    %v1714 = vsel %vm197, %v1358, 0.0
    %1715 = vadd.xlane.f32.xlu0 %v1714
    %v1716 = vpop.xlane.xlu0 %1715
    %v1717 = vsel %vm197, %v1359, 0.0
    %1718 = vadd.xlane.f32.xlu0 %v1717
    %v1719 = vpop.xlane.xlu0 %1718
    %v1720 = vsel %vm197, %v1360, 0.0
    %1721 = vadd.xlane.f32.xlu0 %v1720
    %v1722 = vpop.xlane.xlu0 %1721
    %v1723 = vsel %vm197, %v1361, 0.0
    %1724 = vadd.xlane.f32.xlu0 %v1723
    %v1725 = vpop.xlane.xlu0 %1724
    %v1726 = vsel %vm197, %v1362, 0.0
    %1727 = vadd.xlane.f32.xlu0 %v1726
    %v1728 = vpop.xlane.xlu0 %1727
    %v1729 = vsel %vm197, %v1363, 0.0
    %1730 = vadd.xlane.f32.xlu0 %v1729
    %v1731 = vpop.xlane.xlu0 %1730
    %v1732 = vsel %vm197, %v1364, 0.0
    %1733 = vadd.xlane.f32.xlu0 %v1732
    %v1734 = vpop.xlane.xlu0 %1733
    %v1735 = vsel %vm197, %v1365, 0.0
    %1736 = vadd.xlane.f32.xlu0 %v1735
    %v1737 = vpop.xlane.xlu0 %1736
    %v1738 = vsel %vm197, %v1366, 0.0
    %1739 = vadd.xlane.f32.xlu0 %v1738
    %v1740 = vpop.xlane.xlu0 %1739
    %v1741 = vsel %vm197, %v1367, 0.0
    %1742 = vadd.xlane.f32.xlu0 %v1741
    %v1743 = vpop.xlane.xlu0 %1742
    %v1744 = vsel %vm197, %v1368, 0.0
    %1745 = vadd.xlane.f32.xlu0 %v1744
    %v1746 = vpop.xlane.xlu0 %1745
    %v1747 = vsel %vm197, %v1369, 0.0
    %1748 = vadd.xlane.f32.xlu0 %v1747
    %v1749 = vpop.xlane.xlu0 %1748
    %v1750 = vsel %vm197, %v1370, 0.0
    %1751 = vadd.xlane.f32.xlu0 %v1750
    %v1752 = vpop.xlane.xlu0 %1751
    %v1753 = vsel %vm197, %v1371, 0.0
    %1754 = vadd.xlane.f32.xlu0 %v1753
    %v1755 = vpop.xlane.xlu0 %1754
    %v1884 = vlaneseq
    %v1885 = vand.u32 %v1884, 127
    %v1886 = vperm.slane %v1374, %v1885
    %v1887 = vperm.slane %v1377, %v1885
    %v1888 = vperm.slane %v1380, %v1885
    %v1889 = vperm.slane %v1383, %v1885
    %v1890 = vperm.slane %v1386, %v1885
    %v1891 = vperm.slane %v1389, %v1885
    %v1892 = vperm.slane %v1392, %v1885
    %v1893 = vperm.slane %v1395, %v1885
    %v1894 = vperm.slane %v1398, %v1885
    %v1895 = vperm.slane %v1401, %v1885
    %v1896 = vperm.slane %v1404, %v1885
    %v1897 = vperm.slane %v1407, %v1885
    %v1898 = vperm.slane %v1410, %v1885
    %v1899 = vperm.slane %v1413, %v1885
    %v1900 = vperm.slane %v1416, %v1885
    %v1901 = vperm.slane %v1419, %v1885
    %v1902 = vperm.slane %v1422, %v1885
    %v1903 = vperm.slane %v1425, %v1885
    %v1904 = vperm.slane %v1428, %v1885
    %v1905 = vperm.slane %v1431, %v1885
    %v1906 = vperm.slane %v1434, %v1885
    %v1907 = vperm.slane %v1437, %v1885
    %v1908 = vperm.slane %v1440, %v1885
    %v1909 = vperm.slane %v1443, %v1885
    %v1910 = vperm.slane %v1446, %v1885
    %v1911 = vperm.slane %v1449, %v1885
    %v1912 = vperm.slane %v1452, %v1885
    %v1913 = vperm.slane %v1455, %v1885
    %v1914 = vperm.slane %v1458, %v1885
    %v1915 = vperm.slane %v1461, %v1885
    %v1916 = vperm.slane %v1464, %v1885
    %v1917 = vperm.slane %v1467, %v1885
    %v1918 = vperm.slane %v1470, %v1885
    %v1919 = vperm.slane %v1473, %v1885
    %v1920 = vperm.slane %v1476, %v1885
    %v1921 = vperm.slane %v1479, %v1885
    %v1922 = vperm.slane %v1482, %v1885
    %v1923 = vperm.slane %v1485, %v1885
    %v1924 = vperm.slane %v1488, %v1885
    %v1925 = vperm.slane %v1491, %v1885
    %v1926 = vperm.slane %v1494, %v1885
    %v1927 = vperm.slane %v1497, %v1885
    %v1928 = vperm.slane %v1500, %v1885
    %v1929 = vperm.slane %v1503, %v1885
    %v1930 = vperm.slane %v1506, %v1885
    %v1931 = vperm.slane %v1509, %v1885
    %v1932 = vperm.slane %v1512, %v1885
    %v1933 = vperm.slane %v1515, %v1885
    %v1934 = vperm.slane %v1518, %v1885
    %v1935 = vperm.slane %v1521, %v1885
    %v1936 = vperm.slane %v1524, %v1885
    %v1937 = vperm.slane %v1527, %v1885
    %v1938 = vperm.slane %v1530, %v1885
    %v1939 = vperm.slane %v1533, %v1885
    %v1940 = vperm.slane %v1536, %v1885
    %v1941 = vperm.slane %v1539, %v1885
    %v1942 = vperm.slane %v1542, %v1885
    %v1943 = vperm.slane %v1545, %v1885
    %v1944 = vperm.slane %v1548, %v1885
    %v1945 = vperm.slane %v1551, %v1885
    %v1946 = vperm.slane %v1554, %v1885
    %v1947 = vperm.slane %v1557, %v1885
    %v1948 = vperm.slane %v1560, %v1885
    %v1949 = vperm.slane %v1563, %v1885
    %v1950 = vperm.slane %v1566, %v1885
    %v1951 = vperm.slane %v1569, %v1885
    %v1952 = vperm.slane %v1572, %v1885
    %v1953 = vperm.slane %v1575, %v1885
    %v1954 = vperm.slane %v1578, %v1885
    %v1955 = vperm.slane %v1581, %v1885
    %v1956 = vperm.slane %v1584, %v1885
    %v1957 = vperm.slane %v1587, %v1885
    %v1958 = vperm.slane %v1590, %v1885
    %v1959 = vperm.slane %v1593, %v1885
    %v1960 = vperm.slane %v1596, %v1885
    %v1961 = vperm.slane %v1599, %v1885
    %v1962 = vperm.slane %v1602, %v1885
    %v1963 = vperm.slane %v1605, %v1885
    %v1964 = vperm.slane %v1608, %v1885
    %v1965 = vperm.slane %v1611, %v1885
    %v1966 = vperm.slane %v1614, %v1885
    %v1967 = vperm.slane %v1617, %v1885
    %v1968 = vperm.slane %v1620, %v1885
    %v1969 = vperm.slane %v1623, %v1885
    %v1970 = vperm.slane %v1626, %v1885
    %v1971 = vperm.slane %v1629, %v1885
    %v1972 = vperm.slane %v1632, %v1885
    %v1973 = vperm.slane %v1635, %v1885
    %v1974 = vperm.slane %v1638, %v1885
    %v1975 = vperm.slane %v1641, %v1885
    %v1976 = vperm.slane %v1644, %v1885
    %v1977 = vperm.slane %v1647, %v1885
    %v1978 = vperm.slane %v1650, %v1885
    %v1979 = vperm.slane %v1653, %v1885
    %v1980 = vperm.slane %v1656, %v1885
    %v1981 = vperm.slane %v1659, %v1885
    %v1982 = vperm.slane %v1662, %v1885
    %v1983 = vperm.slane %v1665, %v1885
    %v1984 = vperm.slane %v1668, %v1885
    %v1985 = vperm.slane %v1671, %v1885
    %v1986 = vperm.slane %v1674, %v1885
    %v1987 = vperm.slane %v1677, %v1885
    %v1988 = vperm.slane %v1680, %v1885
    %v1989 = vperm.slane %v1683, %v1885
    %v1990 = vperm.slane %v1686, %v1885
    %v1991 = vperm.slane %v1689, %v1885
    %v1992 = vperm.slane %v1692, %v1885
    %v1993 = vperm.slane %v1695, %v1885
    %v1994 = vperm.slane %v1698, %v1885
    %v1995 = vperm.slane %v1701, %v1885
    %v1996 = vperm.slane %v1704, %v1885
    %v1997 = vperm.slane %v1707, %v1885
    %v1998 = vperm.slane %v1710, %v1885
    %v1999 = vperm.slane %v1713, %v1885
    %v2000 = vperm.slane %v1716, %v1885
    %v2001 = vperm.slane %v1719, %v1885
    %v2002 = vperm.slane %v1722, %v1885
    %v2003 = vperm.slane %v1725, %v1885
    %v2004 = vperm.slane %v1728, %v1885
    %v2005 = vperm.slane %v1731, %v1885
    %v2006 = vperm.slane %v1734, %v1885
    %v2007 = vperm.slane %v1737, %v1885
    %v2008 = vperm.slane %v1740, %v1885
    %v2009 = vperm.slane %v1743, %v1885
    %v2010 = vperm.slane %v1746, %v1885
    %v2011 = vperm.slane %v1749, %v1885
    %v2012 = vperm.slane %v1752, %v1885
    %v2013 = vperm.slane %v1755, %v1885
    %vm2014 = vcmask 1041409
    %v2015 = vsel %vm2014, %v1887, %v1886
    %vm2016 = vcmask 1042434
    %v2017 = vsel %vm2016, %v1888, %v2015
    %vm2018 = vcmask 1043459
    %v2019 = vsel %vm2018, %v1889, %v2017
    %vm2020 = vcmask 1044484
    %v2021 = vsel %vm2020, %v1890, %v2019
    %vm2022 = vcmask 1045509
    %v2023 = vsel %vm2022, %v1891, %v2021
    %vm2024 = vcmask 1046534
    %v2025 = vsel %vm2024, %v1892, %v2023
    %vm2026 = vcmask 1047559
    %v2027 = vsel %vm2026, %v1893, %v2025
    %v2028 = vsel %vm2014, %v1895, %v1894
    %v2029 = vsel %vm2016, %v1896, %v2028
    %v2030 = vsel %vm2018, %v1897, %v2029
    %v2031 = vsel %vm2020, %v1898, %v2030
    %v2032 = vsel %vm2022, %v1899, %v2031
    %v2033 = vsel %vm2024, %v1900, %v2032
    %v2034 = vsel %vm2026, %v1901, %v2033
    %v2035 = vsel %vm2014, %v1903, %v1902
    %v2036 = vsel %vm2016, %v1904, %v2035
    %v2037 = vsel %vm2018, %v1905, %v2036
    %v2038 = vsel %vm2020, %v1906, %v2037
    %v2039 = vsel %vm2022, %v1907, %v2038
    %v2040 = vsel %vm2024, %v1908, %v2039
    %v2041 = vsel %vm2026, %v1909, %v2040
    %v2042 = vsel %vm2014, %v1911, %v1910
    %v2043 = vsel %vm2016, %v1912, %v2042
    %v2044 = vsel %vm2018, %v1913, %v2043
    %v2045 = vsel %vm2020, %v1914, %v2044
    %v2046 = vsel %vm2022, %v1915, %v2045
    %v2047 = vsel %vm2024, %v1916, %v2046
    %v2048 = vsel %vm2026, %v1917, %v2047
    %v2049 = vsel %vm2014, %v1919, %v1918
    %v2050 = vsel %vm2016, %v1920, %v2049
    %v2051 = vsel %vm2018, %v1921, %v2050
    %v2052 = vsel %vm2020, %v1922, %v2051
    %v2053 = vsel %vm2022, %v1923, %v2052
    %v2054 = vsel %vm2024, %v1924, %v2053
    %v2055 = vsel %vm2026, %v1925, %v2054
    %v2056 = vsel %vm2014, %v1927, %v1926
    %v2057 = vsel %vm2016, %v1928, %v2056
    %v2058 = vsel %vm2018, %v1929, %v2057
    %v2059 = vsel %vm2020, %v1930, %v2058
    %v2060 = vsel %vm2022, %v1931, %v2059
    %v2061 = vsel %vm2024, %v1932, %v2060
    %v2062 = vsel %vm2026, %v1933, %v2061
    %v2063 = vsel %vm2014, %v1935, %v1934
    %v2064 = vsel %vm2016, %v1936, %v2063
    %v2065 = vsel %vm2018, %v1937, %v2064
    %v2066 = vsel %vm2020, %v1938, %v2065
    %v2067 = vsel %vm2022, %v1939, %v2066
    %v2068 = vsel %vm2024, %v1940, %v2067
    %v2069 = vsel %vm2026, %v1941, %v2068
    %v2070 = vsel %vm2014, %v1943, %v1942
    %v2071 = vsel %vm2016, %v1944, %v2070
    %v2072 = vsel %vm2018, %v1945, %v2071
    %v2073 = vsel %vm2020, %v1946, %v2072
    %v2074 = vsel %vm2022, %v1947, %v2073
    %v2075 = vsel %vm2024, %v1948, %v2074
    %v2076 = vsel %vm2026, %v1949, %v2075
    %v2077 = vsel %vm2014, %v1951, %v1950
    %v2078 = vsel %vm2016, %v1952, %v2077
    %v2079 = vsel %vm2018, %v1953, %v2078
    %v2080 = vsel %vm2020, %v1954, %v2079
    %v2081 = vsel %vm2022, %v1955, %v2080
    %v2082 = vsel %vm2024, %v1956, %v2081
    %v2083 = vsel %vm2026, %v1957, %v2082
    %v2084 = vsel %vm2014, %v1959, %v1958
    %v2085 = vsel %vm2016, %v1960, %v2084
    %v2086 = vsel %vm2018, %v1961, %v2085
    %v2087 = vsel %vm2020, %v1962, %v2086
    %v2088 = vsel %vm2022, %v1963, %v2087
    %v2089 = vsel %vm2024, %v1964, %v2088
    %v2090 = vsel %vm2026, %v1965, %v2089
    %v2091 = vsel %vm2014, %v1967, %v1966
    %v2092 = vsel %vm2016, %v1968, %v2091
    %v2093 = vsel %vm2018, %v1969, %v2092
    %v2094 = vsel %vm2020, %v1970, %v2093
    %v2095 = vsel %vm2022, %v1971, %v2094
    %v2096 = vsel %vm2024, %v1972, %v2095
    %v2097 = vsel %vm2026, %v1973, %v2096
    %v2098 = vsel %vm2014, %v1975, %v1974
    %v2099 = vsel %vm2016, %v1976, %v2098
    %v2100 = vsel %vm2018, %v1977, %v2099
    %v2101 = vsel %vm2020, %v1978, %v2100
    %v2102 = vsel %vm2022, %v1979, %v2101
    %v2103 = vsel %vm2024, %v1980, %v2102
    %v2104 = vsel %vm2026, %v1981, %v2103
    %v2105 = vsel %vm2014, %v1983, %v1982
    %v2106 = vsel %vm2016, %v1984, %v2105
    %v2107 = vsel %vm2018, %v1985, %v2106
    %v2108 = vsel %vm2020, %v1986, %v2107
    %v2109 = vsel %vm2022, %v1987, %v2108
    %v2110 = vsel %vm2024, %v1988, %v2109
    %v2111 = vsel %vm2026, %v1989, %v2110
    %v2112 = vsel %vm2014, %v1991, %v1990
    %v2113 = vsel %vm2016, %v1992, %v2112
    %v2114 = vsel %vm2018, %v1993, %v2113
    %v2115 = vsel %vm2020, %v1994, %v2114
    %v2116 = vsel %vm2022, %v1995, %v2115
    %v2117 = vsel %vm2024, %v1996, %v2116
    %v2118 = vsel %vm2026, %v1997, %v2117
    %v2119 = vsel %vm2014, %v1999, %v1998
    %v2120 = vsel %vm2016, %v2000, %v2119
    %v2121 = vsel %vm2018, %v2001, %v2120
    %v2122 = vsel %vm2020, %v2002, %v2121
    %v2123 = vsel %vm2022, %v2003, %v2122
    %v2124 = vsel %vm2024, %v2004, %v2123
    %v2125 = vsel %vm2026, %v2005, %v2124
    %v2126 = vsel %vm2014, %v2007, %v2006
    %v2127 = vsel %vm2016, %v2008, %v2126
    %v2128 = vsel %vm2018, %v2009, %v2127
    %v2129 = vsel %vm2020, %v2010, %v2128
    %v2130 = vsel %vm2022, %v2011, %v2129
    %v2131 = vsel %vm2024, %v2012, %v2130
    %v2132 = vsel %vm2026, %v2013, %v2131
    %2149 = vxpose.xlu0.b32.start [1/16] %v2027, 128
    %2150 = vxpose.xlu0.b32.cont [2/16] %v2034, 128
    %2151 = vxpose.xlu0.b32.cont [3/16] %v2041, 128
    %2152 = vxpose.xlu0.b32.cont [4/16] %v2048, 128
    %2153 = vxpose.xlu0.b32.cont [5/16] %v2055, 128
    %2154 = vxpose.xlu0.b32.cont [6/16] %v2062, 128
    %2155 = vxpose.xlu0.b32.cont [7/16] %v2069, 128
    %2156 = vxpose.xlu0.b32.cont [8/16] %v2076, 128
    %2157 = vxpose.xlu0.b32.cont [9/16] %v2083, 128
    %2158 = vxpose.xlu0.b32.cont [10/16] %v2090, 128
    %2159 = vxpose.xlu0.b32.cont [11/16] %v2097, 128
    %2160 = vxpose.xlu0.b32.cont [12/16] %v2104, 128
    %2161 = vxpose.xlu0.b32.cont [13/16] %v2111, 128
    %2162 = vxpose.xlu0.b32.cont [14/16] %v2118, 128
    %2163 = vxpose.xlu0.b32.cont [15/16] %v2125, 128
    %2164 = vxpose.xlu0.b32.end [16/16] %v2132, 128
    %v2165 = vpop.trf.xlu0
    %v2166 = vpop.trf.xlu0
    %v2167 = vpop.trf.xlu0
    %v2168 = vpop.trf.xlu0
    %v2169 = vpop.trf.xlu0
    %v2170 = vpop.trf.xlu0
    %v2171 = vpop.trf.xlu0
    %v2172 = vpop.trf.xlu0
    %v2173 = vpop.trf.xlu0
    %v2174 = vpop.trf.xlu0
    %v2175 = vpop.trf.xlu0
    %v2176 = vpop.trf.xlu0
    %v2177 = vpop.trf.xlu0
    %v2178 = vpop.trf.xlu0
    %v2179 = vpop.trf.xlu0
    %v2180 = vpop.trf.xlu0
    %v2181 = vld [vmem:[%s2] sm:$0xff]
    %vm2182 = vcmp.eq.s32.totalorder %v2181, 0
    %v2183 = vsel %vm2182, -1e+10, %v2165
    %2184 = vst [vmem:[#allocation3] sm:$0xff] %v2183
    // Predicated region
    $region34: #{tpu_custom_call.1} parent=1 // pred_check
      %p2185 = pneg %p27
    $region35: #{tpu_custom_call.1} parent=1 // pred_check_branch
      %2187 = sbr.rel (%p2185) target = $region37
    $region36: #{tpu_custom_call.1} parent=1 // pred_region
      %v2188 = vld [vmem:[#allocation3] sm:$0xff]
      %2189 = vmax.xlane.f32.xlu0 %v2188
      %v2190 = vpop.xlane.xlu0 %2189
      %v2191 = vsub.f32 %v2188, %v2190
      %v2192 = vmul.f32 %v2191, 1.442695
      %v2193 = vpow.pop %v2192
      %2194 = vadd.xlane.f32.xlu0 %v2193
      %v2195 = vpop.xlane.xlu0 %2194
      %v2196 = vrcp.pop %v2195
      %v2197 = vmul.f32 %v2195, %v2196
      %v2198 = vsub.f32 1.0, %v2197
      %v2199 = vmul.f32 %v2196, %v2198
      %v2200 = vadd.f32 %v2196, %v2199
      %vm2201 = vweird.f32 %v2195
      %vm2202 = vweird.f32 %v2196
      %vm2203 = vmor %vm2201, %vm2202
      %v2204 = vsel %vm2203, %v2196, %v2200
      %v2205 = vand.u32 2147483647, %v2195
      %vm2206 = vcmp.eq.f32.partialorder %v2205, 8.507059e+37
      %v2207 = vand.u32 %v2195, 2147483648
      %v2208 = vor.u32 1.1754944e-38, %v2207
      %v2209 = vsel %vm2206, %v2208, %v2204
      %v2210 = vmul.f32 %v2193, %v2209
      %2211 = vst [vmem:[#allocation3] sm:$0xff] %v2210
    $region37: #{tpu_custom_call.1} parent=1 // pred_fallthru
      _
    // Predicated region
    $region38: #{tpu_custom_call.1} parent=1 // pred_check
      _
    $region39: #{tpu_custom_call.1} parent=1 // pred_check_branch
      %2213 = sbr.rel (0) target = $region41
    $region40: #{tpu_custom_call.1} parent=1 // pred_region
      %2215 = vsyncadd [#allocation4], 0
      %s2217 = sshll.u32 [#allocation3], 4
      %s2218 = int_to_ptr.vmem [resolvable:$true] %s2217
      %s2219 = sshll.u32 %s7, 4
      %s2220 = int_to_ptr.hbm [resolvable:$true] %s2219
      %2222 = dma.vmem_to_hbm [thread:$0]  %s2218, 128, %s2220, [#allocation4]
    $region41: #{tpu_custom_call.1} parent=1 // pred_fallthru
      _
    // Predicated region
    $region42: #{tpu_custom_call.1} parent=1 // pred_check
      _
    $region43: #{tpu_custom_call.1} parent=1 // pred_check_branch
      %2224 = sbr.rel (0) target = $region45
    $region44: #{tpu_custom_call.1} parent=1 // pred_region
      %2226 = dma.done [#allocation4], 128
    $region45: #{tpu_custom_call.1} parent=1 // pred_fallthru
      _
    %2227 = vsyncpa [#allocation4], 1

</llo_original>
